<compile_context>
chip_gen: v7x
topology: tpu7x:2x2x1
jax: 0.10.0
libtpu: 0.0.40
codegen_flags: <defaults>
</compile_context>

<pallas_src>
import math

import jax
import jax.numpy as jnp
from jax import lax
from jax.experimental import pallas as pl
from jax.experimental.pallas import tpu as pltpu

# --- model config (GPT-2-like, small synthetic sizes) ---
HIDDEN = 32
N_HEAD = 4
HEAD_DIM = HIDDEN // N_HEAD
INNER = 4 * HIDDEN          # config.n_inner is None -> 4 * hidden_size
LN_EPS = 1e-5               # config.layer_norm_epsilon default
MASK_VALUE = -1e30          # finite additive causal mask (avoids -inf intermediates)


def _layer_norm(x, g, b):
    mu = jnp.mean(x, axis=-1, keepdims=True)
    var = jnp.mean(jnp.square(x - mu), axis=-1, keepdims=True)
    return (x - mu) * lax.rsqrt(var + LN_EPS) * g + b


def _gelu_new(x):
    # HF "gelu_new": 0.5*x*(1+tanh(sqrt(2/pi)*(x+0.044715*x^3)))
    return 0.5 * x * (1.0 + jnp.tanh(
        math.sqrt(2.0 / math.pi) * (x + 0.044715 * x * x * x)))


def gpt2_block_kernel(x_ref,
                      ln1_g_ref, ln1_b_ref,
                      wq_ref, bq_ref, wk_ref, bk_ref, wv_ref, bv_ref,
                      wo_ref, bo_ref,
                      ln2_g_ref, ln2_b_ref,
                      wfc_ref, bfc_ref, wmp_ref, bmp_ref,
                      o_ref):
    f32 = jnp.float32
    bf16 = jnp.bfloat16

    x = x_ref[...]                                    # (S, H) f32, one batch element
    S = x.shape[0]

    # ---- ln_1 (f32 VPU math) ----
    h = _layer_norm(x, ln1_g_ref[...], ln1_b_ref[...])
    h_b = h.astype(bf16)                              # MXU operand, cast once

    # ---- causal additive bias, built in-kernel (iota + compare, hides under MXU) ----
    row = lax.broadcasted_iota(jnp.int32, (S, S), 0)
    col = lax.broadcasted_iota(jnp.int32, (S, S), 1)
    causal_bias = jnp.where(col <= row, 0.0, MASK_VALUE).astype(f32)

    # ---- self-attention: static unrolled per-head loop, HEAD_DIM contractions ----
    dn_qkT = (((1,), (1,)), ((), ()))                 # A @ B^T (contract last dims)
    attn = jnp.zeros_like(x)                          # (S, H) f32 accumulator
    for hd in range(N_HEAD):
        # per-head projections; 1/sqrt(head_dim) pre-folded into wq/bq wrapper-side
        q_h = jnp.dot(h_b, wq_ref[hd], preferred_element_type=f32) + bq_ref[hd]
        k_h = jnp.dot(h_b, wk_ref[hd], preferred_element_type=f32) + bk_ref[hd]
        v_h = jnp.dot(h_b, wv_ref[hd], preferred_element_type=f32) + bv_ref[hd]

        s = lax.dot_general(q_h.astype(bf16), k_h.astype(bf16), dn_qkT,
                            preferred_element_type=f32) + causal_bias
        s = s - jnp.max(s, axis=-1, keepdims=True)
        p = jnp.exp(s)                                # f32 EUP
        p = p * pl.reciprocal(jnp.sum(p, axis=-1, keepdims=True), approx=True)

        ctx_h = jnp.dot(p.astype(bf16), v_h.astype(bf16),
                        preferred_element_type=f32)   # (S, HEAD_DIM)
        attn = attn + jnp.dot(ctx_h.astype(bf16), wo_ref[hd],
                              preferred_element_type=f32)   # (S, H)

    attn = attn + bo_ref[...]
    h1 = x + attn                                     # residual #1

    # ---- ln_2 + MLP (c_fc -> gelu_new -> c_proj) ----
    h2 = _layer_norm(h1, ln2_g_ref[...], ln2_b_ref[...])
    a = jnp.dot(h2.astype(bf16), wfc_ref[...], preferred_element_type=f32) + bfc_ref[...]
    g = _gelu_new(a)                                  # f32 VPU/EUP
    m = jnp.dot(g.astype(bf16), wmp_ref[...], preferred_element_type=f32) + bmp_ref[...]

    o_ref[...] = h1 + m                               # residual #2


@jax.jit
def gpt2_block(x, params):
    B, S, H = x.shape
    f32, bf16 = jnp.float32, jnp.bfloat16
    scale = 1.0 / math.sqrt(HEAD_DIM)

    # --- wrapper-side weight re-layout (layout plumbing, free under XLA) ---
    w_qkv, b_qkv = params["w_qkv"], params["b_qkv"]
    w_q, w_k, w_v = w_qkv[:, :H], w_qkv[:, H:2 * H], w_qkv[:, 2 * H:]
    b_q, b_k, b_v = b_qkv[:, :H], b_qkv[:, H:2 * H], b_qkv[:, 2 * H:]

    def per_head_w(w):                                 # (H, H) -> (N_HEAD, H, HEAD_DIM)
        return jnp.transpose(w.reshape(H, N_HEAD, HEAD_DIM), (1, 0, 2))

    def per_head_b(b):                                 # (1, H) -> (N_HEAD, 1, HEAD_DIM)
        return jnp.transpose(b.reshape(1, N_HEAD, HEAD_DIM), (1, 0, 2))

    wq3 = (per_head_w(w_q) * scale).astype(bf16)       # fold 1/sqrt(d) into q weights
    wk3 = per_head_w(w_k).astype(bf16)
    wv3 = per_head_w(w_v).astype(bf16)
    bq3 = (per_head_b(b_q) * scale).astype(f32)
    bk3 = per_head_b(b_k).astype(f32)
    bv3 = per_head_b(b_v).astype(f32)
    wo3 = params["w_ao"].reshape(N_HEAD, HEAD_DIM, H).astype(bf16)
    w_fc = params["w_fc"].astype(bf16)
    w_mp = params["w_mp"].astype(bf16)

    inputs = (x.astype(f32),
              params["ln1_g"], params["ln1_b"],
              wq3, bq3, wk3, bk3, wv3, bv3,
              wo3, params["b_ao"],
              params["ln2_g"], params["ln2_b"],
              w_fc, params["b_fc"], w_mp, params["b_mp"])

    def whole(arr):                                    # full-array VMEM block, grid-invariant
        return pl.BlockSpec(arr.shape, lambda b, _nd=arr.ndim: (0,) * _nd)

    in_specs = [pl.BlockSpec((None, S, H), lambda b: (b, 0, 0))] + \
               [whole(a) for a in inputs[1:]]
    out_specs = pl.BlockSpec((None, S, H), lambda b: (b, 0, 0))

    # --- advisory cost estimate for XLA's scheduler ---
    flops = (3 * 2 * B * S * H * H                     # q/k/v projections
             + B * 2 * (2 * S * S * H)                 # scores + p@v (all heads)
             + 2 * B * S * H * H                       # attention c_proj
             + 2 * B * S * H * INNER                   # c_fc
             + 2 * B * S * INNER * H)                  # mlp c_proj
    transcendentals = B * N_HEAD * S * (S + 1) + B * S * INNER + 2 * B * S
    bytes_accessed = (sum(int(a.size) * a.dtype.itemsize for a in inputs)
                      + B * S * H * 4)

    out = pl.pallas_call(
        gpt2_block_kernel,
        grid=(B,),
        in_specs=in_specs,
        out_specs=out_specs,
        out_shape=jax.ShapeDtypeStruct((B, S, H), f32),
        compiler_params=pltpu.CompilerParams(dimension_semantics=("parallel",)),
        cost_estimate=pl.CostEstimate(flops=flops,
                                      transcendentals=transcendentals,
                                      bytes_accessed=bytes_accessed),
    )(*inputs)
    return out


def gpt2_block_reference(x, p):
    """Pure-JAX f32 reference of the same forward pass (for correctness check)."""
    def ln(x, g, b):
        mu = x.mean(-1, keepdims=True)
        var = ((x - mu) ** 2).mean(-1, keepdims=True)
        return (x - mu) / jnp.sqrt(var + LN_EPS) * g[0] + b[0]

    B, S, H = x.shape
    h = ln(x, p["ln1_g"], p["ln1_b"])
    qkv = h @ p["w_qkv"] + p["b_qkv"][0]
    q, k, v = jnp.split(qkv, 3, axis=-1)
    q = q.reshape(B, S, N_HEAD, HEAD_DIM).transpose(0, 2, 1, 3)
    k = k.reshape(B, S, N_HEAD, HEAD_DIM).transpose(0, 2, 1, 3)
    v = v.reshape(B, S, N_HEAD, HEAD_DIM).transpose(0, 2, 1, 3)
    scores = jnp.einsum("bhqd,bhkd->bhqk", q, k) / math.sqrt(HEAD_DIM)
    causal = jnp.tril(jnp.ones((S, S), bool))
    scores = jnp.where(causal, scores, jnp.finfo(jnp.float32).min)
    probs = jax.nn.softmax(scores, axis=-1)
    ctx = jnp.einsum("bhqk,bhkd->bhqd", probs, v).transpose(0, 2, 1, 3).reshape(B, S, H)
    attn_out = ctx @ p["w_ao"] + p["b_ao"][0]
    h1 = x + attn_out
    h2 = ln(h1, p["ln2_g"], p["ln2_b"])
    a = h2 @ p["w_fc"] + p["b_fc"][0]
    g = 0.5 * a * (1.0 + jnp.tanh(math.sqrt(2.0 / math.pi) * (a + 0.044715 * a ** 3)))
    m = g @ p["w_mp"] + p["b_mp"][0]
    return h1 + m


def init_params(key):
    ks = jax.random.split(key, 4)
    std = 0.02
    return {
        "ln1_g": jnp.ones((1, HIDDEN), jnp.float32),
        "ln1_b": jnp.zeros((1, HIDDEN), jnp.float32),
        "w_qkv": std * jax.random.normal(ks[0], (HIDDEN, 3 * HIDDEN), jnp.float32),
        "b_qkv": jnp.zeros((1, 3 * HIDDEN), jnp.float32),
        "w_ao": std * jax.random.normal(ks[1], (HIDDEN, HIDDEN), jnp.float32),
        "b_ao": jnp.zeros((1, HIDDEN), jnp.float32),
        "ln2_g": jnp.ones((1, HIDDEN), jnp.float32),
        "ln2_b": jnp.zeros((1, HIDDEN), jnp.float32),
        "w_fc": std * jax.random.normal(ks[2], (HIDDEN, INNER), jnp.float32),
        "b_fc": jnp.zeros((1, INNER), jnp.float32),
        "w_mp": std * jax.random.normal(ks[3], (INNER, HIDDEN), jnp.float32),
        "b_mp": jnp.zeros((1, HIDDEN), jnp.float32),
    }


if __name__ == "__main__":
    key = jax.random.PRNGKey(0)
    k_x, k_p = jax.random.split(key)

    B, S, H = 2, 8, HIDDEN
    x = jax.random.normal(k_x, (B, S, H), jnp.float32)
    params = init_params(k_p)

    out = gpt2_block(x, params)
    out = jax.block_until_ready(out)

    ref = gpt2_block_reference(x, params)
    assert out.shape == (B, S, H)
    # bf16 MXU operands + f32 reference -> bf16-level tolerance
    assert jnp.allclose(out, ref, atol=1e-2, rtol=1e-2), "mismatch vs reference"

    print("KERNEL_OK")
</pallas_src>

<mosaic_0001>
module attributes {stable_mosaic.version = 11 : i64} {
  func.func @gpt2_block_kernel(%arg0: i32, %arg1: memref<1x8x32xf32, #tpu.memory_space<vmem>>, %arg2: memref<1x32xf32, #tpu.memory_space<vmem>>, %arg3: memref<1x32xf32, #tpu.memory_space<vmem>>, %arg4: memref<4x32x8xbf16, #tpu.memory_space<vmem>>, %arg5: memref<4x1x8xf32, #tpu.memory_space<vmem>>, %arg6: memref<4x32x8xbf16, #tpu.memory_space<vmem>>, %arg7: memref<4x1x8xf32, #tpu.memory_space<vmem>>, %arg8: memref<4x32x8xbf16, #tpu.memory_space<vmem>>, %arg9: memref<4x1x8xf32, #tpu.memory_space<vmem>>, %arg10: memref<4x8x32xbf16, #tpu.memory_space<vmem>>, %arg11: memref<1x32xf32, #tpu.memory_space<vmem>>, %arg12: memref<1x32xf32, #tpu.memory_space<vmem>>, %arg13: memref<1x32xf32, #tpu.memory_space<vmem>>, %arg14: memref<32x128xbf16, #tpu.memory_space<vmem>>, %arg15: memref<1x128xf32, #tpu.memory_space<vmem>>, %arg16: memref<128x32xbf16, #tpu.memory_space<vmem>>, %arg17: memref<1x32xf32, #tpu.memory_space<vmem>>, %arg18: memref<1x8x32xf32, #tpu.memory_space<vmem>>) attributes {dimension_semantics = [#tpu.dimension_semantics<parallel>], iteration_bounds = array<i64: 2>, scalar_prefetch = 0 : i64, scratch_operands = 0 : i64, tpu.core_type = #tpu.core_type<tc>, window_params = [{transform_indices = @transform_0, window_bounds = array<i64: 1, 8, 32>}, {pipeline_mode = #tpu.pipeline_mode<synchronous>, transform_indices = @transform_1, window_bounds = array<i64: 1, 32>}, {pipeline_mode = #tpu.pipeline_mode<synchronous>, transform_indices = @transform_2, window_bounds = array<i64: 1, 32>}, {pipeline_mode = #tpu.pipeline_mode<synchronous>, transform_indices = @transform_3, window_bounds = array<i64: 4, 32, 8>}, {pipeline_mode = #tpu.pipeline_mode<synchronous>, transform_indices = @transform_4, window_bounds = array<i64: 4, 1, 8>}, {pipeline_mode = #tpu.pipeline_mode<synchronous>, transform_indices = @transform_5, window_bounds = array<i64: 4, 32, 8>}, {pipeline_mode = #tpu.pipeline_mode<synchronous>, transform_indices = @transform_6, window_bounds = array<i64: 4, 1, 8>}, {pipeline_mode = #tpu.pipeline_mode<synchronous>, transform_indices = @transform_7, window_bounds = array<i64: 4, 32, 8>}, {pipeline_mode = #tpu.pipeline_mode<synchronous>, transform_indices = @transform_8, window_bounds = array<i64: 4, 1, 8>}, {pipeline_mode = #tpu.pipeline_mode<synchronous>, transform_indices = @transform_9, window_bounds = array<i64: 4, 8, 32>}, {pipeline_mode = #tpu.pipeline_mode<synchronous>, transform_indices = @transform_10, window_bounds = array<i64: 1, 32>}, {pipeline_mode = #tpu.pipeline_mode<synchronous>, transform_indices = @transform_11, window_bounds = array<i64: 1, 32>}, {pipeline_mode = #tpu.pipeline_mode<synchronous>, transform_indices = @transform_12, window_bounds = array<i64: 1, 32>}, {pipeline_mode = #tpu.pipeline_mode<synchronous>, transform_indices = @transform_13, window_bounds = array<i64: 32, 128>}, {pipeline_mode = #tpu.pipeline_mode<synchronous>, transform_indices = @transform_14, window_bounds = array<i64: 1, 128>}, {pipeline_mode = #tpu.pipeline_mode<synchronous>, transform_indices = @transform_15, window_bounds = array<i64: 128, 32>}, {pipeline_mode = #tpu.pipeline_mode<synchronous>, transform_indices = @transform_16, window_bounds = array<i64: 1, 32>}, {transform_indices = @transform_17, window_bounds = array<i64: 1, 8, 32>}]} {
    %c0 = arith.constant 0 : index
    %c0_0 = arith.constant 0 : index
    %c0_1 = arith.constant 0 : index
    %0 = vector.load %arg1[%c0, %c0_0, %c0_1] : memref<1x8x32xf32, #tpu.memory_space<vmem>>, vector<1x8x32xf32>
    %1 = vector.shape_cast %0 : vector<1x8x32xf32> to vector<8x32xf32>
    %c0_2 = arith.constant 0 : index
    %c0_3 = arith.constant 0 : index
    %2 = vector.load %arg2[%c0_2, %c0_3] : memref<1x32xf32, #tpu.memory_space<vmem>>, vector<1x32xf32>
    %c0_4 = arith.constant 0 : index
    %c0_5 = arith.constant 0 : index
    %3 = vector.load %arg3[%c0_4, %c0_5] : memref<1x32xf32, #tpu.memory_space<vmem>>, vector<1x32xf32>
    %cst = arith.constant dense<0.000000e+00> : vector<8xf32>
    %4 = vector.multi_reduction <add>, %1, %cst [1] : vector<8x32xf32> to vector<8xf32>
    %5 = vector.shape_cast %4 : vector<8xf32> to vector<8x1xf32>
    %cst_6 = arith.constant 3.200000e+01 : f32
    %6 = vector.broadcast %cst_6 : f32 to vector<8x1xf32>
    %7 = arith.divf %5, %6 : vector<8x1xf32>
    %8 = vector.broadcast %7 : vector<8x1xf32> to vector<8x32xf32>
    %9 = arith.subf %1, %8 : vector<8x32xf32>
    %10 = arith.mulf %9, %9 : vector<8x32xf32>
    %cst_7 = arith.constant dense<0.000000e+00> : vector<8xf32>
    %11 = vector.multi_reduction <add>, %10, %cst_7 [1] : vector<8x32xf32> to vector<8xf32>
    %12 = vector.shape_cast %11 : vector<8xf32> to vector<8x1xf32>
    %cst_8 = arith.constant 3.200000e+01 : f32
    %13 = vector.broadcast %cst_8 : f32 to vector<8x1xf32>
    %14 = arith.divf %12, %13 : vector<8x1xf32>
    %15 = vector.broadcast %7 : vector<8x1xf32> to vector<8x32xf32>
    %16 = arith.subf %1, %15 : vector<8x32xf32>
    %cst_9 = arith.constant 9.99999974E-6 : f32
    %17 = vector.broadcast %cst_9 : f32 to vector<8x1xf32>
    %18 = arith.addf %14, %17 : vector<8x1xf32>
    %19 = math.rsqrt %18 : vector<8x1xf32>
    %20 = vector.broadcast %19 : vector<8x1xf32> to vector<8x32xf32>
    %21 = arith.mulf %16, %20 : vector<8x32xf32>
    %22 = vector.broadcast %2 : vector<1x32xf32> to vector<8x32xf32>
    %23 = arith.mulf %21, %22 : vector<8x32xf32>
    %24 = vector.broadcast %3 : vector<1x32xf32> to vector<8x32xf32>
    %25 = arith.addf %23, %24 : vector<8x32xf32>
    %26 = arith.truncf %25 : vector<8x32xf32> to vector<8x32xbf16>
    %27 = tpu.iota {dimensions = array<i32: 0>} : vector<8x8xi32>
    %28 = tpu.iota {dimensions = array<i32: 1>} : vector<8x8xi32>
    %29 = arith.cmpi sle, %28, %27 : vector<8x8xi32>
    %cst_10 = arith.constant 0.000000e+00 : f32
    %cst_11 = arith.constant -1.000000e+30 : f32
    %30 = vector.broadcast %cst_10 : f32 to vector<8x8xf32>
    %31 = vector.broadcast %cst_11 : f32 to vector<8x8xf32>
    %32 = arith.select %29, %30, %31 : vector<8x8xi1>, vector<8x8xf32>
    %cst_12 = arith.constant 0.000000e+00 : f32
    %33 = vector.broadcast %cst_12 : f32 to vector<8x32xf32>
    %c0_13 = arith.constant 0 : index
    %c0_14 = arith.constant 0 : index
    %c0_15 = arith.constant 0 : index
    %34 = vector.load %arg4[%c0_13, %c0_14, %c0_15] : memref<4x32x8xbf16, #tpu.memory_space<vmem>>, vector<1x32x8xbf16>
    %35 = vector.shape_cast %34 : vector<1x32x8xbf16> to vector<32x8xbf16>
    %cst_16 = arith.constant dense<0.000000e+00> : vector<8x8xf32>
    %36 = tpu.matmul %26, %35, %cst_16 {dimension_numbers = #tpu.dot_dimension_numbers<[1], [0], [0], [1], [0, 0, 1, 1], [], []>} : vector<8x32xbf16>, vector<32x8xbf16>, vector<8x8xf32> -> vector<8x8xf32>
    %c0_17 = arith.constant 0 : index
    %c0_18 = arith.constant 0 : index
    %c0_19 = arith.constant 0 : index
    %37 = vector.load %arg5[%c0_17, %c0_18, %c0_19] : memref<4x1x8xf32, #tpu.memory_space<vmem>>, vector<1x1x8xf32>
    %38 = vector.shape_cast %37 : vector<1x1x8xf32> to vector<1x8xf32>
    %39 = vector.broadcast %38 : vector<1x8xf32> to vector<8x8xf32>
    %40 = arith.addf %36, %39 : vector<8x8xf32>
    %c0_20 = arith.constant 0 : index
    %c0_21 = arith.constant 0 : index
    %c0_22 = arith.constant 0 : index
    %41 = vector.load %arg6[%c0_20, %c0_21, %c0_22] : memref<4x32x8xbf16, #tpu.memory_space<vmem>>, vector<1x32x8xbf16>
    %42 = vector.shape_cast %41 : vector<1x32x8xbf16> to vector<32x8xbf16>
    %cst_23 = arith.constant dense<0.000000e+00> : vector<8x8xf32>
    %43 = tpu.matmul %26, %42, %cst_23 {dimension_numbers = #tpu.dot_dimension_numbers<[1], [0], [0], [1], [0, 0, 1, 1], [], []>} : vector<8x32xbf16>, vector<32x8xbf16>, vector<8x8xf32> -> vector<8x8xf32>
    %c0_24 = arith.constant 0 : index
    %c0_25 = arith.constant 0 : index
    %c0_26 = arith.constant 0 : index
    %44 = vector.load %arg7[%c0_24, %c0_25, %c0_26] : memref<4x1x8xf32, #tpu.memory_space<vmem>>, vector<1x1x8xf32>
    %45 = vector.shape_cast %44 : vector<1x1x8xf32> to vector<1x8xf32>
    %46 = vector.broadcast %45 : vector<1x8xf32> to vector<8x8xf32>
    %47 = arith.addf %43, %46 : vector<8x8xf32>
    %c0_27 = arith.constant 0 : index
    %c0_28 = arith.constant 0 : index
    %c0_29 = arith.constant 0 : index
    %48 = vector.load %arg8[%c0_27, %c0_28, %c0_29] : memref<4x32x8xbf16, #tpu.memory_space<vmem>>, vector<1x32x8xbf16>
    %49 = vector.shape_cast %48 : vector<1x32x8xbf16> to vector<32x8xbf16>
    %cst_30 = arith.constant dense<0.000000e+00> : vector<8x8xf32>
    %50 = tpu.matmul %26, %49, %cst_30 {dimension_numbers = #tpu.dot_dimension_numbers<[1], [0], [0], [1], [0, 0, 1, 1], [], []>} : vector<8x32xbf16>, vector<32x8xbf16>, vector<8x8xf32> -> vector<8x8xf32>
    %c0_31 = arith.constant 0 : index
    %c0_32 = arith.constant 0 : index
    %c0_33 = arith.constant 0 : index
    %51 = vector.load %arg9[%c0_31, %c0_32, %c0_33] : memref<4x1x8xf32, #tpu.memory_space<vmem>>, vector<1x1x8xf32>
    %52 = vector.shape_cast %51 : vector<1x1x8xf32> to vector<1x8xf32>
    %53 = vector.broadcast %52 : vector<1x8xf32> to vector<8x8xf32>
    %54 = arith.addf %50, %53 : vector<8x8xf32>
    %55 = arith.truncf %40 : vector<8x8xf32> to vector<8x8xbf16>
    %56 = arith.truncf %47 : vector<8x8xf32> to vector<8x8xbf16>
    %cst_34 = arith.constant dense<0.000000e+00> : vector<8x8xf32>
    %57 = tpu.matmul %55, %56, %cst_34 {dimension_numbers = #tpu.dot_dimension_numbers<[1], [1], [0], [0], [0, 0, 1, 0], [], []>} : vector<8x8xbf16>, vector<8x8xbf16>, vector<8x8xf32> -> vector<8x8xf32>
    %58 = arith.addf %57, %32 : vector<8x8xf32>
    %cst_35 = arith.constant dense<0xFF800000> : vector<8xf32>
    %59 = vector.multi_reduction <maximumf>, %58, %cst_35 [1] : vector<8x8xf32> to vector<8xf32>
    %60 = vector.shape_cast %59 : vector<8xf32> to vector<8x1xf32>
    %61 = vector.broadcast %60 : vector<8x1xf32> to vector<8x8xf32>
    %62 = arith.subf %58, %61 : vector<8x8xf32>
    %63 = math.exp %62 : vector<8x8xf32>
    %cst_36 = arith.constant dense<0.000000e+00> : vector<8xf32>
    %64 = vector.multi_reduction <add>, %63, %cst_36 [1] : vector<8x8xf32> to vector<8xf32>
    %65 = vector.shape_cast %64 : vector<8xf32> to vector<8x1xf32>
    %66 = tpu.reciprocal %65 {approx = true} : vector<8x1xf32> -> vector<8x1xf32>
    %67 = vector.broadcast %66 : vector<8x1xf32> to vector<8x8xf32>
    %68 = arith.mulf %63, %67 : vector<8x8xf32>
    %69 = arith.truncf %68 : vector<8x8xf32> to vector<8x8xbf16>
    %70 = arith.truncf %54 : vector<8x8xf32> to vector<8x8xbf16>
    %cst_37 = arith.constant dense<0.000000e+00> : vector<8x8xf32>
    %71 = tpu.matmul %69, %70, %cst_37 {dimension_numbers = #tpu.dot_dimension_numbers<[1], [0], [0], [1], [0, 0, 1, 1], [], []>} : vector<8x8xbf16>, vector<8x8xbf16>, vector<8x8xf32> -> vector<8x8xf32>
    %72 = arith.truncf %71 : vector<8x8xf32> to vector<8x8xbf16>
    %c0_38 = arith.constant 0 : index
    %c0_39 = arith.constant 0 : index
    %c0_40 = arith.constant 0 : index
    %73 = vector.load %arg10[%c0_38, %c0_39, %c0_40] : memref<4x8x32xbf16, #tpu.memory_space<vmem>>, vector<1x8x32xbf16>
    %74 = vector.shape_cast %73 : vector<1x8x32xbf16> to vector<8x32xbf16>
    %cst_41 = arith.constant dense<0.000000e+00> : vector<8x32xf32>
    %75 = tpu.matmul %72, %74, %cst_41 {dimension_numbers = #tpu.dot_dimension_numbers<[1], [0], [0], [1], [0, 0, 1, 1], [], []>} : vector<8x8xbf16>, vector<8x32xbf16>, vector<8x32xf32> -> vector<8x32xf32>
    %76 = arith.addf %33, %75 : vector<8x32xf32>
    %c1 = arith.constant 1 : index
    %c0_42 = arith.constant 0 : index
    %c0_43 = arith.constant 0 : index
    %77 = vector.load %arg4[%c1, %c0_42, %c0_43] : memref<4x32x8xbf16, #tpu.memory_space<vmem>>, vector<1x32x8xbf16>
    %78 = vector.shape_cast %77 : vector<1x32x8xbf16> to vector<32x8xbf16>
    %cst_44 = arith.constant dense<0.000000e+00> : vector<8x8xf32>
    %79 = tpu.matmul %26, %78, %cst_44 {dimension_numbers = #tpu.dot_dimension_numbers<[1], [0], [0], [1], [0, 0, 1, 1], [], []>} : vector<8x32xbf16>, vector<32x8xbf16>, vector<8x8xf32> -> vector<8x8xf32>
    %c1_45 = arith.constant 1 : index
    %c0_46 = arith.constant 0 : index
    %c0_47 = arith.constant 0 : index
    %80 = vector.load %arg5[%c1_45, %c0_46, %c0_47] : memref<4x1x8xf32, #tpu.memory_space<vmem>>, vector<1x1x8xf32>
    %81 = vector.shape_cast %80 : vector<1x1x8xf32> to vector<1x8xf32>
    %82 = vector.broadcast %81 : vector<1x8xf32> to vector<8x8xf32>
    %83 = arith.addf %79, %82 : vector<8x8xf32>
    %c1_48 = arith.constant 1 : index
    %c0_49 = arith.constant 0 : index
    %c0_50 = arith.constant 0 : index
    %84 = vector.load %arg6[%c1_48, %c0_49, %c0_50] : memref<4x32x8xbf16, #tpu.memory_space<vmem>>, vector<1x32x8xbf16>
    %85 = vector.shape_cast %84 : vector<1x32x8xbf16> to vector<32x8xbf16>
    %cst_51 = arith.constant dense<0.000000e+00> : vector<8x8xf32>
    %86 = tpu.matmul %26, %85, %cst_51 {dimension_numbers = #tpu.dot_dimension_numbers<[1], [0], [0], [1], [0, 0, 1, 1], [], []>} : vector<8x32xbf16>, vector<32x8xbf16>, vector<8x8xf32> -> vector<8x8xf32>
    %c1_52 = arith.constant 1 : index
    %c0_53 = arith.constant 0 : index
    %c0_54 = arith.constant 0 : index
    %87 = vector.load %arg7[%c1_52, %c0_53, %c0_54] : memref<4x1x8xf32, #tpu.memory_space<vmem>>, vector<1x1x8xf32>
    %88 = vector.shape_cast %87 : vector<1x1x8xf32> to vector<1x8xf32>
    %89 = vector.broadcast %88 : vector<1x8xf32> to vector<8x8xf32>
    %90 = arith.addf %86, %89 : vector<8x8xf32>
    %c1_55 = arith.constant 1 : index
    %c0_56 = arith.constant 0 : index
    %c0_57 = arith.constant 0 : index
    %91 = vector.load %arg8[%c1_55, %c0_56, %c0_57] : memref<4x32x8xbf16, #tpu.memory_space<vmem>>, vector<1x32x8xbf16>
    %92 = vector.shape_cast %91 : vector<1x32x8xbf16> to vector<32x8xbf16>
    %cst_58 = arith.constant dense<0.000000e+00> : vector<8x8xf32>
    %93 = tpu.matmul %26, %92, %cst_58 {dimension_numbers = #tpu.dot_dimension_numbers<[1], [0], [0], [1], [0, 0, 1, 1], [], []>} : vector<8x32xbf16>, vector<32x8xbf16>, vector<8x8xf32> -> vector<8x8xf32>
    %c1_59 = arith.constant 1 : index
    %c0_60 = arith.constant 0 : index
    %c0_61 = arith.constant 0 : index
    %94 = vector.load %arg9[%c1_59, %c0_60, %c0_61] : memref<4x1x8xf32, #tpu.memory_space<vmem>>, vector<1x1x8xf32>
    %95 = vector.shape_cast %94 : vector<1x1x8xf32> to vector<1x8xf32>
    %96 = vector.broadcast %95 : vector<1x8xf32> to vector<8x8xf32>
    %97 = arith.addf %93, %96 : vector<8x8xf32>
    %98 = arith.truncf %83 : vector<8x8xf32> to vector<8x8xbf16>
    %99 = arith.truncf %90 : vector<8x8xf32> to vector<8x8xbf16>
    %cst_62 = arith.constant dense<0.000000e+00> : vector<8x8xf32>
    %100 = tpu.matmul %98, %99, %cst_62 {dimension_numbers = #tpu.dot_dimension_numbers<[1], [1], [0], [0], [0, 0, 1, 0], [], []>} : vector<8x8xbf16>, vector<8x8xbf16>, vector<8x8xf32> -> vector<8x8xf32>
    %101 = arith.addf %100, %32 : vector<8x8xf32>
    %cst_63 = arith.constant dense<0xFF800000> : vector<8xf32>
    %102 = vector.multi_reduction <maximumf>, %101, %cst_63 [1] : vector<8x8xf32> to vector<8xf32>
    %103 = vector.shape_cast %102 : vector<8xf32> to vector<8x1xf32>
    %104 = vector.broadcast %103 : vector<8x1xf32> to vector<8x8xf32>
    %105 = arith.subf %101, %104 : vector<8x8xf32>
    %106 = math.exp %105 : vector<8x8xf32>
    %cst_64 = arith.constant dense<0.000000e+00> : vector<8xf32>
    %107 = vector.multi_reduction <add>, %106, %cst_64 [1] : vector<8x8xf32> to vector<8xf32>
    %108 = vector.shape_cast %107 : vector<8xf32> to vector<8x1xf32>
    %109 = tpu.reciprocal %108 {approx = true} : vector<8x1xf32> -> vector<8x1xf32>
    %110 = vector.broadcast %109 : vector<8x1xf32> to vector<8x8xf32>
    %111 = arith.mulf %106, %110 : vector<8x8xf32>
    %112 = arith.truncf %111 : vector<8x8xf32> to vector<8x8xbf16>
    %113 = arith.truncf %97 : vector<8x8xf32> to vector<8x8xbf16>
    %cst_65 = arith.constant dense<0.000000e+00> : vector<8x8xf32>
    %114 = tpu.matmul %112, %113, %cst_65 {dimension_numbers = #tpu.dot_dimension_numbers<[1], [0], [0], [1], [0, 0, 1, 1], [], []>} : vector<8x8xbf16>, vector<8x8xbf16>, vector<8x8xf32> -> vector<8x8xf32>
    %115 = arith.truncf %114 : vector<8x8xf32> to vector<8x8xbf16>
    %c1_66 = arith.constant 1 : index
    %c0_67 = arith.constant 0 : index
    %c0_68 = arith.constant 0 : index
    %116 = vector.load %arg10[%c1_66, %c0_67, %c0_68] : memref<4x8x32xbf16, #tpu.memory_space<vmem>>, vector<1x8x32xbf16>
    %117 = vector.shape_cast %116 : vector<1x8x32xbf16> to vector<8x32xbf16>
    %cst_69 = arith.constant dense<0.000000e+00> : vector<8x32xf32>
    %118 = tpu.matmul %115, %117, %cst_69 {dimension_numbers = #tpu.dot_dimension_numbers<[1], [0], [0], [1], [0, 0, 1, 1], [], []>} : vector<8x8xbf16>, vector<8x32xbf16>, vector<8x32xf32> -> vector<8x32xf32>
    %119 = arith.addf %76, %118 : vector<8x32xf32>
    %c2 = arith.constant 2 : index
    %c0_70 = arith.constant 0 : index
    %c0_71 = arith.constant 0 : index
    %120 = vector.load %arg4[%c2, %c0_70, %c0_71] : memref<4x32x8xbf16, #tpu.memory_space<vmem>>, vector<1x32x8xbf16>
    %121 = vector.shape_cast %120 : vector<1x32x8xbf16> to vector<32x8xbf16>
    %cst_72 = arith.constant dense<0.000000e+00> : vector<8x8xf32>
    %122 = tpu.matmul %26, %121, %cst_72 {dimension_numbers = #tpu.dot_dimension_numbers<[1], [0], [0], [1], [0, 0, 1, 1], [], []>} : vector<8x32xbf16>, vector<32x8xbf16>, vector<8x8xf32> -> vector<8x8xf32>
    %c2_73 = arith.constant 2 : index
    %c0_74 = arith.constant 0 : index
    %c0_75 = arith.constant 0 : index
    %123 = vector.load %arg5[%c2_73, %c0_74, %c0_75] : memref<4x1x8xf32, #tpu.memory_space<vmem>>, vector<1x1x8xf32>
    %124 = vector.shape_cast %123 : vector<1x1x8xf32> to vector<1x8xf32>
    %125 = vector.broadcast %124 : vector<1x8xf32> to vector<8x8xf32>
    %126 = arith.addf %122, %125 : vector<8x8xf32>
    %c2_76 = arith.constant 2 : index
    %c0_77 = arith.constant 0 : index
    %c0_78 = arith.constant 0 : index
    %127 = vector.load %arg6[%c2_76, %c0_77, %c0_78] : memref<4x32x8xbf16, #tpu.memory_space<vmem>>, vector<1x32x8xbf16>
    %128 = vector.shape_cast %127 : vector<1x32x8xbf16> to vector<32x8xbf16>
    %cst_79 = arith.constant dense<0.000000e+00> : vector<8x8xf32>
    %129 = tpu.matmul %26, %128, %cst_79 {dimension_numbers = #tpu.dot_dimension_numbers<[1], [0], [0], [1], [0, 0, 1, 1], [], []>} : vector<8x32xbf16>, vector<32x8xbf16>, vector<8x8xf32> -> vector<8x8xf32>
    %c2_80 = arith.constant 2 : index
    %c0_81 = arith.constant 0 : index
    %c0_82 = arith.constant 0 : index
    %130 = vector.load %arg7[%c2_80, %c0_81, %c0_82] : memref<4x1x8xf32, #tpu.memory_space<vmem>>, vector<1x1x8xf32>
    %131 = vector.shape_cast %130 : vector<1x1x8xf32> to vector<1x8xf32>
    %132 = vector.broadcast %131 : vector<1x8xf32> to vector<8x8xf32>
    %133 = arith.addf %129, %132 : vector<8x8xf32>
    %c2_83 = arith.constant 2 : index
    %c0_84 = arith.constant 0 : index
    %c0_85 = arith.constant 0 : index
    %134 = vector.load %arg8[%c2_83, %c0_84, %c0_85] : memref<4x32x8xbf16, #tpu.memory_space<vmem>>, vector<1x32x8xbf16>
    %135 = vector.shape_cast %134 : vector<1x32x8xbf16> to vector<32x8xbf16>
    %cst_86 = arith.constant dense<0.000000e+00> : vector<8x8xf32>
    %136 = tpu.matmul %26, %135, %cst_86 {dimension_numbers = #tpu.dot_dimension_numbers<[1], [0], [0], [1], [0, 0, 1, 1], [], []>} : vector<8x32xbf16>, vector<32x8xbf16>, vector<8x8xf32> -> vector<8x8xf32>
    %c2_87 = arith.constant 2 : index
    %c0_88 = arith.constant 0 : index
    %c0_89 = arith.constant 0 : index
    %137 = vector.load %arg9[%c2_87, %c0_88, %c0_89] : memref<4x1x8xf32, #tpu.memory_space<vmem>>, vector<1x1x8xf32>
    %138 = vector.shape_cast %137 : vector<1x1x8xf32> to vector<1x8xf32>
    %139 = vector.broadcast %138 : vector<1x8xf32> to vector<8x8xf32>
    %140 = arith.addf %136, %139 : vector<8x8xf32>
    %141 = arith.truncf %126 : vector<8x8xf32> to vector<8x8xbf16>
    %142 = arith.truncf %133 : vector<8x8xf32> to vector<8x8xbf16>
    %cst_90 = arith.constant dense<0.000000e+00> : vector<8x8xf32>
    %143 = tpu.matmul %141, %142, %cst_90 {dimension_numbers = #tpu.dot_dimension_numbers<[1], [1], [0], [0], [0, 0, 1, 0], [], []>} : vector<8x8xbf16>, vector<8x8xbf16>, vector<8x8xf32> -> vector<8x8xf32>
    %144 = arith.addf %143, %32 : vector<8x8xf32>
    %cst_91 = arith.constant dense<0xFF800000> : vector<8xf32>
    %145 = vector.multi_reduction <maximumf>, %144, %cst_91 [1] : vector<8x8xf32> to vector<8xf32>
    %146 = vector.shape_cast %145 : vector<8xf32> to vector<8x1xf32>
    %147 = vector.broadcast %146 : vector<8x1xf32> to vector<8x8xf32>
    %148 = arith.subf %144, %147 : vector<8x8xf32>
    %149 = math.exp %148 : vector<8x8xf32>
    %cst_92 = arith.constant dense<0.000000e+00> : vector<8xf32>
    %150 = vector.multi_reduction <add>, %149, %cst_92 [1] : vector<8x8xf32> to vector<8xf32>
    %151 = vector.shape_cast %150 : vector<8xf32> to vector<8x1xf32>
    %152 = tpu.reciprocal %151 {approx = true} : vector<8x1xf32> -> vector<8x1xf32>
    %153 = vector.broadcast %152 : vector<8x1xf32> to vector<8x8xf32>
    %154 = arith.mulf %149, %153 : vector<8x8xf32>
    %155 = arith.truncf %154 : vector<8x8xf32> to vector<8x8xbf16>
    %156 = arith.truncf %140 : vector<8x8xf32> to vector<8x8xbf16>
    %cst_93 = arith.constant dense<0.000000e+00> : vector<8x8xf32>
    %157 = tpu.matmul %155, %156, %cst_93 {dimension_numbers = #tpu.dot_dimension_numbers<[1], [0], [0], [1], [0, 0, 1, 1], [], []>} : vector<8x8xbf16>, vector<8x8xbf16>, vector<8x8xf32> -> vector<8x8xf32>
    %158 = arith.truncf %157 : vector<8x8xf32> to vector<8x8xbf16>
    %c2_94 = arith.constant 2 : index
    %c0_95 = arith.constant 0 : index
    %c0_96 = arith.constant 0 : index
    %159 = vector.load %arg10[%c2_94, %c0_95, %c0_96] : memref<4x8x32xbf16, #tpu.memory_space<vmem>>, vector<1x8x32xbf16>
    %160 = vector.shape_cast %159 : vector<1x8x32xbf16> to vector<8x32xbf16>
    %cst_97 = arith.constant dense<0.000000e+00> : vector<8x32xf32>
    %161 = tpu.matmul %158, %160, %cst_97 {dimension_numbers = #tpu.dot_dimension_numbers<[1], [0], [0], [1], [0, 0, 1, 1], [], []>} : vector<8x8xbf16>, vector<8x32xbf16>, vector<8x32xf32> -> vector<8x32xf32>
    %162 = arith.addf %119, %161 : vector<8x32xf32>
    %c3 = arith.constant 3 : index
    %c0_98 = arith.constant 0 : index
    %c0_99 = arith.constant 0 : index
    %163 = vector.load %arg4[%c3, %c0_98, %c0_99] : memref<4x32x8xbf16, #tpu.memory_space<vmem>>, vector<1x32x8xbf16>
    %164 = vector.shape_cast %163 : vector<1x32x8xbf16> to vector<32x8xbf16>
    %cst_100 = arith.constant dense<0.000000e+00> : vector<8x8xf32>
    %165 = tpu.matmul %26, %164, %cst_100 {dimension_numbers = #tpu.dot_dimension_numbers<[1], [0], [0], [1], [0, 0, 1, 1], [], []>} : vector<8x32xbf16>, vector<32x8xbf16>, vector<8x8xf32> -> vector<8x8xf32>
    %c3_101 = arith.constant 3 : index
    %c0_102 = arith.constant 0 : index
    %c0_103 = arith.constant 0 : index
    %166 = vector.load %arg5[%c3_101, %c0_102, %c0_103] : memref<4x1x8xf32, #tpu.memory_space<vmem>>, vector<1x1x8xf32>
    %167 = vector.shape_cast %166 : vector<1x1x8xf32> to vector<1x8xf32>
    %168 = vector.broadcast %167 : vector<1x8xf32> to vector<8x8xf32>
    %169 = arith.addf %165, %168 : vector<8x8xf32>
    %c3_104 = arith.constant 3 : index
    %c0_105 = arith.constant 0 : index
    %c0_106 = arith.constant 0 : index
    %170 = vector.load %arg6[%c3_104, %c0_105, %c0_106] : memref<4x32x8xbf16, #tpu.memory_space<vmem>>, vector<1x32x8xbf16>
    %171 = vector.shape_cast %170 : vector<1x32x8xbf16> to vector<32x8xbf16>
    %cst_107 = arith.constant dense<0.000000e+00> : vector<8x8xf32>
    %172 = tpu.matmul %26, %171, %cst_107 {dimension_numbers = #tpu.dot_dimension_numbers<[1], [0], [0], [1], [0, 0, 1, 1], [], []>} : vector<8x32xbf16>, vector<32x8xbf16>, vector<8x8xf32> -> vector<8x8xf32>
    %c3_108 = arith.constant 3 : index
    %c0_109 = arith.constant 0 : index
    %c0_110 = arith.constant 0 : index
    %173 = vector.load %arg7[%c3_108, %c0_109, %c0_110] : memref<4x1x8xf32, #tpu.memory_space<vmem>>, vector<1x1x8xf32>
    %174 = vector.shape_cast %173 : vector<1x1x8xf32> to vector<1x8xf32>
    %175 = vector.broadcast %174 : vector<1x8xf32> to vector<8x8xf32>
    %176 = arith.addf %172, %175 : vector<8x8xf32>
    %c3_111 = arith.constant 3 : index
    %c0_112 = arith.constant 0 : index
    %c0_113 = arith.constant 0 : index
    %177 = vector.load %arg8[%c3_111, %c0_112, %c0_113] : memref<4x32x8xbf16, #tpu.memory_space<vmem>>, vector<1x32x8xbf16>
    %178 = vector.shape_cast %177 : vector<1x32x8xbf16> to vector<32x8xbf16>
    %cst_114 = arith.constant dense<0.000000e+00> : vector<8x8xf32>
    %179 = tpu.matmul %26, %178, %cst_114 {dimension_numbers = #tpu.dot_dimension_numbers<[1], [0], [0], [1], [0, 0, 1, 1], [], []>} : vector<8x32xbf16>, vector<32x8xbf16>, vector<8x8xf32> -> vector<8x8xf32>
    %c3_115 = arith.constant 3 : index
    %c0_116 = arith.constant 0 : index
    %c0_117 = arith.constant 0 : index
    %180 = vector.load %arg9[%c3_115, %c0_116, %c0_117] : memref<4x1x8xf32, #tpu.memory_space<vmem>>, vector<1x1x8xf32>
    %181 = vector.shape_cast %180 : vector<1x1x8xf32> to vector<1x8xf32>
    %182 = vector.broadcast %181 : vector<1x8xf32> to vector<8x8xf32>
    %183 = arith.addf %179, %182 : vector<8x8xf32>
    %184 = arith.truncf %169 : vector<8x8xf32> to vector<8x8xbf16>
    %185 = arith.truncf %176 : vector<8x8xf32> to vector<8x8xbf16>
    %cst_118 = arith.constant dense<0.000000e+00> : vector<8x8xf32>
    %186 = tpu.matmul %184, %185, %cst_118 {dimension_numbers = #tpu.dot_dimension_numbers<[1], [1], [0], [0], [0, 0, 1, 0], [], []>} : vector<8x8xbf16>, vector<8x8xbf16>, vector<8x8xf32> -> vector<8x8xf32>
    %187 = arith.addf %186, %32 : vector<8x8xf32>
    %cst_119 = arith.constant dense<0xFF800000> : vector<8xf32>
    %188 = vector.multi_reduction <maximumf>, %187, %cst_119 [1] : vector<8x8xf32> to vector<8xf32>
    %189 = vector.shape_cast %188 : vector<8xf32> to vector<8x1xf32>
    %190 = vector.broadcast %189 : vector<8x1xf32> to vector<8x8xf32>
    %191 = arith.subf %187, %190 : vector<8x8xf32>
    %192 = math.exp %191 : vector<8x8xf32>
    %cst_120 = arith.constant dense<0.000000e+00> : vector<8xf32>
    %193 = vector.multi_reduction <add>, %192, %cst_120 [1] : vector<8x8xf32> to vector<8xf32>
    %194 = vector.shape_cast %193 : vector<8xf32> to vector<8x1xf32>
    %195 = tpu.reciprocal %194 {approx = true} : vector<8x1xf32> -> vector<8x1xf32>
    %196 = vector.broadcast %195 : vector<8x1xf32> to vector<8x8xf32>
    %197 = arith.mulf %192, %196 : vector<8x8xf32>
    %198 = arith.truncf %197 : vector<8x8xf32> to vector<8x8xbf16>
    %199 = arith.truncf %183 : vector<8x8xf32> to vector<8x8xbf16>
    %cst_121 = arith.constant dense<0.000000e+00> : vector<8x8xf32>
    %200 = tpu.matmul %198, %199, %cst_121 {dimension_numbers = #tpu.dot_dimension_numbers<[1], [0], [0], [1], [0, 0, 1, 1], [], []>} : vector<8x8xbf16>, vector<8x8xbf16>, vector<8x8xf32> -> vector<8x8xf32>
    %201 = arith.truncf %200 : vector<8x8xf32> to vector<8x8xbf16>
    %c3_122 = arith.constant 3 : index
    %c0_123 = arith.constant 0 : index
    %c0_124 = arith.constant 0 : index
    %202 = vector.load %arg10[%c3_122, %c0_123, %c0_124] : memref<4x8x32xbf16, #tpu.memory_space<vmem>>, vector<1x8x32xbf16>
    %203 = vector.shape_cast %202 : vector<1x8x32xbf16> to vector<8x32xbf16>
    %cst_125 = arith.constant dense<0.000000e+00> : vector<8x32xf32>
    %204 = tpu.matmul %201, %203, %cst_125 {dimension_numbers = #tpu.dot_dimension_numbers<[1], [0], [0], [1], [0, 0, 1, 1], [], []>} : vector<8x8xbf16>, vector<8x32xbf16>, vector<8x32xf32> -> vector<8x32xf32>
    %205 = arith.addf %162, %204 : vector<8x32xf32>
    %c0_126 = arith.constant 0 : index
    %c0_127 = arith.constant 0 : index
    %206 = vector.load %arg11[%c0_126, %c0_127] : memref<1x32xf32, #tpu.memory_space<vmem>>, vector<1x32xf32>
    %207 = vector.broadcast %206 : vector<1x32xf32> to vector<8x32xf32>
    %208 = arith.addf %205, %207 : vector<8x32xf32>
    %209 = arith.addf %1, %208 : vector<8x32xf32>
    %c0_128 = arith.constant 0 : index
    %c0_129 = arith.constant 0 : index
    %210 = vector.load %arg12[%c0_128, %c0_129] : memref<1x32xf32, #tpu.memory_space<vmem>>, vector<1x32xf32>
    %c0_130 = arith.constant 0 : index
    %c0_131 = arith.constant 0 : index
    %211 = vector.load %arg13[%c0_130, %c0_131] : memref<1x32xf32, #tpu.memory_space<vmem>>, vector<1x32xf32>
    %cst_132 = arith.constant dense<0.000000e+00> : vector<8xf32>
    %212 = vector.multi_reduction <add>, %209, %cst_132 [1] : vector<8x32xf32> to vector<8xf32>
    %213 = vector.shape_cast %212 : vector<8xf32> to vector<8x1xf32>
    %cst_133 = arith.constant 3.200000e+01 : f32
    %214 = vector.broadcast %cst_133 : f32 to vector<8x1xf32>
    %215 = arith.divf %213, %214 : vector<8x1xf32>
    %216 = vector.broadcast %215 : vector<8x1xf32> to vector<8x32xf32>
    %217 = arith.subf %209, %216 : vector<8x32xf32>
    %218 = arith.mulf %217, %217 : vector<8x32xf32>
    %cst_134 = arith.constant dense<0.000000e+00> : vector<8xf32>
    %219 = vector.multi_reduction <add>, %218, %cst_134 [1] : vector<8x32xf32> to vector<8xf32>
    %220 = vector.shape_cast %219 : vector<8xf32> to vector<8x1xf32>
    %cst_135 = arith.constant 3.200000e+01 : f32
    %221 = vector.broadcast %cst_135 : f32 to vector<8x1xf32>
    %222 = arith.divf %220, %221 : vector<8x1xf32>
    %223 = vector.broadcast %215 : vector<8x1xf32> to vector<8x32xf32>
    %224 = arith.subf %209, %223 : vector<8x32xf32>
    %cst_136 = arith.constant 9.99999974E-6 : f32
    %225 = vector.broadcast %cst_136 : f32 to vector<8x1xf32>
    %226 = arith.addf %222, %225 : vector<8x1xf32>
    %227 = math.rsqrt %226 : vector<8x1xf32>
    %228 = vector.broadcast %227 : vector<8x1xf32> to vector<8x32xf32>
    %229 = arith.mulf %224, %228 : vector<8x32xf32>
    %230 = vector.broadcast %210 : vector<1x32xf32> to vector<8x32xf32>
    %231 = arith.mulf %229, %230 : vector<8x32xf32>
    %232 = vector.broadcast %211 : vector<1x32xf32> to vector<8x32xf32>
    %233 = arith.addf %231, %232 : vector<8x32xf32>
    %234 = arith.truncf %233 : vector<8x32xf32> to vector<8x32xbf16>
    %c0_137 = arith.constant 0 : index
    %c0_138 = arith.constant 0 : index
    %235 = vector.load %arg14[%c0_137, %c0_138] : memref<32x128xbf16, #tpu.memory_space<vmem>>, vector<32x128xbf16>
    %cst_139 = arith.constant dense<0.000000e+00> : vector<8x128xf32>
    %236 = tpu.matmul %234, %235, %cst_139 {dimension_numbers = #tpu.dot_dimension_numbers<[1], [0], [0], [1], [0, 0, 1, 1], [], []>} : vector<8x32xbf16>, vector<32x128xbf16>, vector<8x128xf32> -> vector<8x128xf32>
    %c0_140 = arith.constant 0 : index
    %c0_141 = arith.constant 0 : index
    %237 = vector.load %arg15[%c0_140, %c0_141] : memref<1x128xf32, #tpu.memory_space<vmem>>, vector<1x128xf32>
    %238 = vector.broadcast %237 : vector<1x128xf32> to vector<8x128xf32>
    %239 = arith.addf %236, %238 : vector<8x128xf32>
    %cst_142 = arith.constant 5.000000e-01 : f32
    %240 = vector.broadcast %cst_142 : f32 to vector<8x128xf32>
    %241 = arith.mulf %240, %239 : vector<8x128xf32>
    %cst_143 = arith.constant 4.471500e-02 : f32
    %242 = vector.broadcast %cst_143 : f32 to vector<8x128xf32>
    %243 = arith.mulf %242, %239 : vector<8x128xf32>
    %244 = arith.mulf %243, %239 : vector<8x128xf32>
    %245 = arith.mulf %244, %239 : vector<8x128xf32>
    %246 = arith.addf %239, %245 : vector<8x128xf32>
    %cst_144 = arith.constant 0.797884583 : f32
    %247 = vector.broadcast %cst_144 : f32 to vector<8x128xf32>
    %248 = arith.mulf %247, %246 : vector<8x128xf32>
    %249 = math.tanh %248 : vector<8x128xf32>
    %cst_145 = arith.constant 1.000000e+00 : f32
    %250 = vector.broadcast %cst_145 : f32 to vector<8x128xf32>
    %251 = arith.addf %250, %249 : vector<8x128xf32>
    %252 = arith.mulf %241, %251 : vector<8x128xf32>
    %253 = arith.truncf %252 : vector<8x128xf32> to vector<8x128xbf16>
    %c0_146 = arith.constant 0 : index
    %c0_147 = arith.constant 0 : index
    %254 = vector.load %arg16[%c0_146, %c0_147] : memref<128x32xbf16, #tpu.memory_space<vmem>>, vector<128x32xbf16>
    %cst_148 = arith.constant dense<0.000000e+00> : vector<8x32xf32>
    %255 = tpu.matmul %253, %254, %cst_148 {dimension_numbers = #tpu.dot_dimension_numbers<[1], [0], [0], [1], [0, 0, 1, 1], [], []>} : vector<8x128xbf16>, vector<128x32xbf16>, vector<8x32xf32> -> vector<8x32xf32>
    %c0_149 = arith.constant 0 : index
    %c0_150 = arith.constant 0 : index
    %256 = vector.load %arg17[%c0_149, %c0_150] : memref<1x32xf32, #tpu.memory_space<vmem>>, vector<1x32xf32>
    %257 = vector.broadcast %256 : vector<1x32xf32> to vector<8x32xf32>
    %258 = arith.addf %255, %257 : vector<8x32xf32>
    %259 = arith.addf %209, %258 : vector<8x32xf32>
    %c0_151 = arith.constant 0 : index
    %c0_152 = arith.constant 0 : index
    %c0_153 = arith.constant 0 : index
    %260 = vector.load %arg18[%c0_151, %c0_152, %c0_153] : memref<1x8x32xf32, #tpu.memory_space<vmem>>, vector<1x8x32xf32>
    %261 = vector.shape_cast %260 : vector<1x8x32xf32> to vector<8x32xf32>
    %262 = vector.shape_cast %259 : vector<8x32xf32> to vector<1x8x32xf32>
    tpu.vector_store %arg18[%c0_151, %c0_152, %c0_153], %262 {strides = array<i32>} : memref<1x8x32xf32, #tpu.memory_space<vmem>>, vector<1x8x32xf32>,
    return
  }
  func.func @transform_0(%arg0: i32) -> (i32, i32, i32) {
    %c0_i32 = arith.constant 0 : i32
    %c0_i32_0 = arith.constant 0 : i32
    %c0_i32_1 = arith.constant 0 : i32
    return %arg0, %c0_i32, %c0_i32_0 : i32, i32, i32
  }
  func.func @transform_1(%arg0: i32) -> (i32, i32) {
    %c0_i32 = arith.constant 0 : i32
    %c0_i32_0 = arith.constant 0 : i32
    %c0_i32_1 = arith.constant 0 : i32
    return %c0_i32, %c0_i32_0 : i32, i32
  }
  func.func @transform_2(%arg0: i32) -> (i32, i32) {
    %c0_i32 = arith.constant 0 : i32
    %c0_i32_0 = arith.constant 0 : i32
    %c0_i32_1 = arith.constant 0 : i32
    return %c0_i32, %c0_i32_0 : i32, i32
  }
  func.func @transform_3(%arg0: i32) -> (i32, i32, i32) {
    %c0_i32 = arith.constant 0 : i32
    %c0_i32_0 = arith.constant 0 : i32
    %c0_i32_1 = arith.constant 0 : i32
    %c0_i32_2 = arith.constant 0 : i32
    return %c0_i32, %c0_i32_0, %c0_i32_1 : i32, i32, i32
  }
  func.func @transform_4(%arg0: i32) -> (i32, i32, i32) {
    %c0_i32 = arith.constant 0 : i32
    %c0_i32_0 = arith.constant 0 : i32
    %c0_i32_1 = arith.constant 0 : i32
    %c0_i32_2 = arith.constant 0 : i32
    return %c0_i32, %c0_i32_0, %c0_i32_1 : i32, i32, i32
  }
  func.func @transform_5(%arg0: i32) -> (i32, i32, i32) {
    %c0_i32 = arith.constant 0 : i32
    %c0_i32_0 = arith.constant 0 : i32
    %c0_i32_1 = arith.constant 0 : i32
    %c0_i32_2 = arith.constant 0 : i32
    return %c0_i32, %c0_i32_0, %c0_i32_1 : i32, i32, i32
  }
  func.func @transform_6(%arg0: i32) -> (i32, i32, i32) {
    %c0_i32 = arith.constant 0 : i32
    %c0_i32_0 = arith.constant 0 : i32
    %c0_i32_1 = arith.constant 0 : i32
    %c0_i32_2 = arith.constant 0 : i32
    return %c0_i32, %c0_i32_0, %c0_i32_1 : i32, i32, i32
  }
  func.func @transform_7(%arg0: i32) -> (i32, i32, i32) {
    %c0_i32 = arith.constant 0 : i32
    %c0_i32_0 = arith.constant 0 : i32
    %c0_i32_1 = arith.constant 0 : i32
    %c0_i32_2 = arith.constant 0 : i32
    return %c0_i32, %c0_i32_0, %c0_i32_1 : i32, i32, i32
  }
  func.func @transform_8(%arg0: i32) -> (i32, i32, i32) {
    %c0_i32 = arith.constant 0 : i32
    %c0_i32_0 = arith.constant 0 : i32
    %c0_i32_1 = arith.constant 0 : i32
    %c0_i32_2 = arith.constant 0 : i32
    return %c0_i32, %c0_i32_0, %c0_i32_1 : i32, i32, i32
  }
  func.func @transform_9(%arg0: i32) -> (i32, i32, i32) {
    %c0_i32 = arith.constant 0 : i32
    %c0_i32_0 = arith.constant 0 : i32
    %c0_i32_1 = arith.constant 0 : i32
    %c0_i32_2 = arith.constant 0 : i32
    return %c0_i32, %c0_i32_0, %c0_i32_1 : i32, i32, i32
  }
  func.func @transform_10(%arg0: i32) -> (i32, i32) {
    %c0_i32 = arith.constant 0 : i32
    %c0_i32_0 = arith.constant 0 : i32
    %c0_i32_1 = arith.constant 0 : i32
    return %c0_i32, %c0_i32_0 : i32, i32
  }
  func.func @transform_11(%arg0: i32) -> (i32, i32) {
    %c0_i32 = arith.constant 0 : i32
    %c0_i32_0 = arith.constant 0 : i32
    %c0_i32_1 = arith.constant 0 : i32
    return %c0_i32, %c0_i32_0 : i32, i32
  }
  func.func @transform_12(%arg0: i32) -> (i32, i32) {
    %c0_i32 = arith.constant 0 : i32
    %c0_i32_0 = arith.constant 0 : i32
    %c0_i32_1 = arith.constant 0 : i32
    return %c0_i32, %c0_i32_0 : i32, i32
  }
  func.func @transform_13(%arg0: i32) -> (i32, i32) {
    %c0_i32 = arith.constant 0 : i32
    %c0_i32_0 = arith.constant 0 : i32
    %c0_i32_1 = arith.constant 0 : i32
    return %c0_i32, %c0_i32_0 : i32, i32
  }
  func.func @transform_14(%arg0: i32) -> (i32, i32) {
    %c0_i32 = arith.constant 0 : i32
    %c0_i32_0 = arith.constant 0 : i32
    %c0_i32_1 = arith.constant 0 : i32
    return %c0_i32, %c0_i32_0 : i32, i32
  }
  func.func @transform_15(%arg0: i32) -> (i32, i32) {
    %c0_i32 = arith.constant 0 : i32
    %c0_i32_0 = arith.constant 0 : i32
    %c0_i32_1 = arith.constant 0 : i32
    return %c0_i32, %c0_i32_0 : i32, i32
  }
  func.func @transform_16(%arg0: i32) -> (i32, i32) {
    %c0_i32 = arith.constant 0 : i32
    %c0_i32_0 = arith.constant 0 : i32
    %c0_i32_1 = arith.constant 0 : i32
    return %c0_i32, %c0_i32_0 : i32, i32
  }
  func.func @transform_17(%arg0: i32) -> (i32, i32, i32) {
    %c0_i32 = arith.constant 0 : i32
    %c0_i32_0 = arith.constant 0 : i32
    %c0_i32_1 = arith.constant 0 : i32
    return %arg0, %c0_i32, %c0_i32_0 : i32, i32, i32
  }
}

</mosaic_0001>

<llo_original>
// kernel: gpt2_block.1
$region0: #{gpt2_block.1}
  #allocation0 [shape = 'u32[]', space=smem, size = 0x4, offset = 0x4, fixed_abs, tag = 'smem constant byte address 0x4 - core index']
  #allocation1 [shape = 'u32[144,128]{1,0:T(1,128)}', space=vmem, size = 0x12000, scoped, tag = 'internal scratch']
  %s0 = inlined_call_operand.vmem [shape: f32[2,8,32], index: 0, kind: input, shape index: {}]
  %s1 = inlined_call_operand.vmem [shape: f32[1,32], index: 1, kind: input, shape index: {}]
  %s2 = inlined_call_operand.vmem [shape: f32[1,32], index: 2, kind: input, shape index: {}]
  %s3 = inlined_call_operand.vmem [shape: bf16[4,32,8], index: 3, kind: input, shape index: {}]
  %s4 = inlined_call_operand.vmem [shape: f32[4,1,8], index: 4, kind: input, shape index: {}]
  %s5 = inlined_call_operand.vmem [shape: bf16[4,32,8], index: 5, kind: input, shape index: {}]
  %s6 = inlined_call_operand.vmem [shape: f32[4,1,8], index: 6, kind: input, shape index: {}]
  %s7 = inlined_call_operand.vmem [shape: bf16[4,32,8], index: 7, kind: input, shape index: {}]
  %s8 = inlined_call_operand.vmem [shape: f32[4,1,8], index: 8, kind: input, shape index: {}]
  %s9 = inlined_call_operand.vmem [shape: bf16[4,8,32], index: 9, kind: input, shape index: {}]
  %s10 = inlined_call_operand.vmem [shape: f32[1,32], index: 10, kind: input, shape index: {}]
  %s11 = inlined_call_operand.vmem [shape: f32[1,32], index: 11, kind: input, shape index: {}]
  %s12 = inlined_call_operand.vmem [shape: f32[1,32], index: 12, kind: input, shape index: {}]
  %s13 = inlined_call_operand.vmem [shape: bf16[32,128], index: 13, kind: input, shape index: {}]
  %s14 = inlined_call_operand.vmem [shape: f32[1,128], index: 14, kind: input, shape index: {}]
  %s15 = inlined_call_operand.vmem [shape: bf16[128,32], index: 15, kind: input, shape index: {}]
  %s16 = inlined_call_operand.vmem [shape: f32[1,32], index: 16, kind: input, shape index: {}]
  %s17 = inlined_call_operand.hbm [shape: f32[2,8,32], index: 17, kind: output, shape index: {}]
  %s18 = sld [smem:[#allocation0]]
  $region101: #{gpt2_block.1} parent=0
    _
  %s20 = ssub.s32 1, %s18
  %s21 = scalar_select 0, %s20, %s18
  $region1: #{gpt2_block.1} parent=0
    #allocation2 [shape = 'u8[8192]{0}', space=vmem, size = 0x2000, scoped, tag = 'output window, operand 0']
    #allocation3 [shape = 's32[2]{0}', space=sflag, size = 0x8, scoped, tag = 'scoped memory for gpt2_block.1']
    %22 = vsyncpa [#allocation3], 0
    %s23 = scalar_lea.sflag [#allocation3], 1
    %24 = vsyncpa %s23, 0
    loop: start=0, step=1, limit=4
    $region2: #{gpt2_block.1} parent=1 // loop_pre_header
      _
    $region3: #{gpt2_block.1} parent=1 // loop_header
      %s26 = sphi 0, %s30
      %p27 = scmp.ge.s32.totalorder %s26, 4
      %s36 = sphi 0, %s38
      %s39 = sphi 0, %s36
      %s40 = sphi 0, %s39
      %s56 = sphi 0, %s40
      %s60 = sphi 0, %s60
      %s62 = sphi 0, %s60
      %s63 = sphi 0, %s62
      %s77 = sphi 0, %s63
      %s81 = sphi 0, %s81
      %s83 = sphi 0, %s81
      %s84 = sphi 0, %s83
      %s98 = sphi 0, %s84
      %s102 = sphi 0, %s102
      %s104 = sphi 0, %s102
      %s105 = sphi 0, %s104
      %s119 = sphi 0, %s105
      %s123 = sphi 0, %s123
      %s125 = sphi 0, %s123
      %s126 = sphi 0, %s125
      %s140 = sphi 0, %s126
      %s144 = sphi 0, %s144
      %s146 = sphi 0, %s144
      %s147 = sphi 0, %s146
      %s161 = sphi 0, %s147
      %s165 = sphi 0, %s165
      %s167 = sphi 0, %s165
      %s168 = sphi 0, %s167
      %s182 = sphi 0, %s168
      %s186 = sphi 0, %s186
      %s188 = sphi 0, %s186
      %s189 = sphi 0, %s188
      %s203 = sphi 0, %s189
      %s207 = sphi 0, %s207
      %s209 = sphi 0, %s207
      %s210 = sphi 0, %s209
      %s224 = sphi 0, %s210
      %s228 = sphi 0, %s228
      %s230 = sphi 0, %s228
      %s231 = sphi 0, %s230
      %s245 = sphi 0, %s231
      %s249 = sphi 0, %s249
      %s251 = sphi 0, %s249
      %s252 = sphi 0, %s251
      %s266 = sphi 0, %s252
      %s270 = sphi 0, %s270
      %s272 = sphi 0, %s270
      %s273 = sphi 0, %s272
      %s287 = sphi 0, %s273
      %s291 = sphi 0, %s291
      %s293 = sphi 0, %s291
      %s294 = sphi 0, %s293
      %s308 = sphi 0, %s294
      %s312 = sphi 0, %s312
      %s314 = sphi 0, %s312
      %s315 = sphi 0, %s314
      %s329 = sphi 0, %s315
      %s333 = sphi 0, %s333
      %s335 = sphi 0, %s333
      %s336 = sphi 0, %s335
      %s350 = sphi 0, %s336
      %s354 = sphi 0, %s354
      %s356 = sphi 0, %s354
      %s357 = sphi 0, %s356
      %s371 = sphi 0, %s357
      %s375 = sphi 0, %s375
      %s377 = sphi 0, %s375
      %s378 = sphi 0, %s377
      %s392 = sphi 0, %s378
      %s398 = sphi 0, %s400
      %s401 = sphi 0, %s398
      %s402 = sphi 0, %s401
      %s418 = sphi 0, %s402
    $region4: #{gpt2_block.1} parent=1 // loop_header_branch
      %29 = sbr.rel (%p27) target = $region8
    $region5: #{gpt2_block.1} parent=1 // loop_body
      %s31 = ssub.s32 %s26, 1
      %s32 = ssub.s32 %s26, 2
      %s33 = sadd.s32 %s26, 1
      %s34 = ssub.s32 %s26, %s33
      %p35 = scmp.eq.s32.totalorder %s34, 0
      %s37 = sadd.s32 %s36, 1
      %s38 = scalar_select %p35, %s36, %s37
      %p41 = pneg %p35
      %p42 = scmp.eq.s32.totalorder %s26, 1
      %p43 = por %p41, %p42
      %p44 = scmp.ne.s32.totalorder %s36, %s39
      %p45 = scmp.eq.s32.totalorder %s26, 0
      %p46 = por %p44, %p45
      %p47 = scmp.ne.s32.totalorder %s36, %s39
      %p48 = scmp.eq.s32.totalorder %s31, 1
      %p49 = por %p47, %p48
      %p50 = scmp.ne.s32.totalorder %s39, %s40
      %p51 = scmp.eq.s32.totalorder %s31, 0
      %p52 = por %p50, %p51
      %p53 = scmp.ne.s32.totalorder %s39, %s40
      %p54 = scmp.eq.s32.totalorder %s32, 1
      %p55 = por %p53, %p54
      %p57 = scmp.ne.s32.totalorder %s40, %s56
      %p58 = scmp.eq.s32.totalorder %s32, 0
      %p59 = por %p57, %p58
      %s61 = sadd.s32 %s60, 1
      %p64 = scmp.eq.s32.totalorder %s26, 1
      %p65 = scmp.ne.s32.totalorder %s60, %s62
      %p66 = scmp.eq.s32.totalorder %s26, 0
      %p67 = por %p65, %p66
      %p68 = scmp.ne.s32.totalorder %s60, %s62
      %p69 = scmp.eq.s32.totalorder %s31, 1
      %p70 = por %p68, %p69
      %p71 = scmp.ne.s32.totalorder %s62, %s63
      %p72 = scmp.eq.s32.totalorder %s31, 0
      %p73 = por %p71, %p72
      %p74 = scmp.ne.s32.totalorder %s62, %s63
      %p75 = scmp.eq.s32.totalorder %s32, 1
      %p76 = por %p74, %p75
      %p78 = scmp.ne.s32.totalorder %s63, %s77
      %p79 = scmp.eq.s32.totalorder %s32, 0
      %p80 = por %p78, %p79
      %s82 = sadd.s32 %s81, 1
      %p85 = scmp.eq.s32.totalorder %s26, 1
      %p86 = scmp.ne.s32.totalorder %s81, %s83
      %p87 = scmp.eq.s32.totalorder %s26, 0
      %p88 = por %p86, %p87
      %p89 = scmp.ne.s32.totalorder %s81, %s83
      %p90 = scmp.eq.s32.totalorder %s31, 1
      %p91 = por %p89, %p90
      %p92 = scmp.ne.s32.totalorder %s83, %s84
      %p93 = scmp.eq.s32.totalorder %s31, 0
      %p94 = por %p92, %p93
      %p95 = scmp.ne.s32.totalorder %s83, %s84
      %p96 = scmp.eq.s32.totalorder %s32, 1
      %p97 = por %p95, %p96
      %p99 = scmp.ne.s32.totalorder %s84, %s98
      %p100 = scmp.eq.s32.totalorder %s32, 0
      %p101 = por %p99, %p100
      %s103 = sadd.s32 %s102, 1
      %p106 = scmp.eq.s32.totalorder %s26, 1
      %p107 = scmp.ne.s32.totalorder %s102, %s104
      %p108 = scmp.eq.s32.totalorder %s26, 0
      %p109 = por %p107, %p108
      %p110 = scmp.ne.s32.totalorder %s102, %s104
      %p111 = scmp.eq.s32.totalorder %s31, 1
      %p112 = por %p110, %p111
      %p113 = scmp.ne.s32.totalorder %s104, %s105
      %p114 = scmp.eq.s32.totalorder %s31, 0
      %p115 = por %p113, %p114
      %p116 = scmp.ne.s32.totalorder %s104, %s105
      %p117 = scmp.eq.s32.totalorder %s32, 1
      %p118 = por %p116, %p117
      %p120 = scmp.ne.s32.totalorder %s105, %s119
      %p121 = scmp.eq.s32.totalorder %s32, 0
      %p122 = por %p120, %p121
      %s124 = sadd.s32 %s123, 1
      %p127 = scmp.eq.s32.totalorder %s26, 1
      %p128 = scmp.ne.s32.totalorder %s123, %s125
      %p129 = scmp.eq.s32.totalorder %s26, 0
      %p130 = por %p128, %p129
      %p131 = scmp.ne.s32.totalorder %s123, %s125
      %p132 = scmp.eq.s32.totalorder %s31, 1
      %p133 = por %p131, %p132
      %p134 = scmp.ne.s32.totalorder %s125, %s126
      %p135 = scmp.eq.s32.totalorder %s31, 0
      %p136 = por %p134, %p135
      %p137 = scmp.ne.s32.totalorder %s125, %s126
      %p138 = scmp.eq.s32.totalorder %s32, 1
      %p139 = por %p137, %p138
      %p141 = scmp.ne.s32.totalorder %s126, %s140
      %p142 = scmp.eq.s32.totalorder %s32, 0
      %p143 = por %p141, %p142
      %s145 = sadd.s32 %s144, 1
      %p148 = scmp.eq.s32.totalorder %s26, 1
      %p149 = scmp.ne.s32.totalorder %s144, %s146
      %p150 = scmp.eq.s32.totalorder %s26, 0
      %p151 = por %p149, %p150
      %p152 = scmp.ne.s32.totalorder %s144, %s146
      %p153 = scmp.eq.s32.totalorder %s31, 1
      %p154 = por %p152, %p153
      %p155 = scmp.ne.s32.totalorder %s146, %s147
      %p156 = scmp.eq.s32.totalorder %s31, 0
      %p157 = por %p155, %p156
      %p158 = scmp.ne.s32.totalorder %s146, %s147
      %p159 = scmp.eq.s32.totalorder %s32, 1
      %p160 = por %p158, %p159
      %p162 = scmp.ne.s32.totalorder %s147, %s161
      %p163 = scmp.eq.s32.totalorder %s32, 0
      %p164 = por %p162, %p163
      %s166 = sadd.s32 %s165, 1
      %p169 = scmp.eq.s32.totalorder %s26, 1
      %p170 = scmp.ne.s32.totalorder %s165, %s167
      %p171 = scmp.eq.s32.totalorder %s26, 0
      %p172 = por %p170, %p171
      %p173 = scmp.ne.s32.totalorder %s165, %s167
      %p174 = scmp.eq.s32.totalorder %s31, 1
      %p175 = por %p173, %p174
      %p176 = scmp.ne.s32.totalorder %s167, %s168
      %p177 = scmp.eq.s32.totalorder %s31, 0
      %p178 = por %p176, %p177
      %p179 = scmp.ne.s32.totalorder %s167, %s168
      %p180 = scmp.eq.s32.totalorder %s32, 1
      %p181 = por %p179, %p180
      %p183 = scmp.ne.s32.totalorder %s168, %s182
      %p184 = scmp.eq.s32.totalorder %s32, 0
      %p185 = por %p183, %p184
      %s187 = sadd.s32 %s186, 1
      %p190 = scmp.eq.s32.totalorder %s26, 1
      %p191 = scmp.ne.s32.totalorder %s186, %s188
      %p192 = scmp.eq.s32.totalorder %s26, 0
      %p193 = por %p191, %p192
      %p194 = scmp.ne.s32.totalorder %s186, %s188
      %p195 = scmp.eq.s32.totalorder %s31, 1
      %p196 = por %p194, %p195
      %p197 = scmp.ne.s32.totalorder %s188, %s189
      %p198 = scmp.eq.s32.totalorder %s31, 0
      %p199 = por %p197, %p198
      %p200 = scmp.ne.s32.totalorder %s188, %s189
      %p201 = scmp.eq.s32.totalorder %s32, 1
      %p202 = por %p200, %p201
      %p204 = scmp.ne.s32.totalorder %s189, %s203
      %p205 = scmp.eq.s32.totalorder %s32, 0
      %p206 = por %p204, %p205
      %s208 = sadd.s32 %s207, 1
      %p211 = scmp.eq.s32.totalorder %s26, 1
      %p212 = scmp.ne.s32.totalorder %s207, %s209
      %p213 = scmp.eq.s32.totalorder %s26, 0
      %p214 = por %p212, %p213
      %p215 = scmp.ne.s32.totalorder %s207, %s209
      %p216 = scmp.eq.s32.totalorder %s31, 1
      %p217 = por %p215, %p216
      %p218 = scmp.ne.s32.totalorder %s209, %s210
      %p219 = scmp.eq.s32.totalorder %s31, 0
      %p220 = por %p218, %p219
      %p221 = scmp.ne.s32.totalorder %s209, %s210
      %p222 = scmp.eq.s32.totalorder %s32, 1
      %p223 = por %p221, %p222
      %p225 = scmp.ne.s32.totalorder %s210, %s224
      %p226 = scmp.eq.s32.totalorder %s32, 0
      %p227 = por %p225, %p226
      %s229 = sadd.s32 %s228, 1
      %p232 = scmp.eq.s32.totalorder %s26, 1
      %p233 = scmp.ne.s32.totalorder %s228, %s230
      %p234 = scmp.eq.s32.totalorder %s26, 0
      %p235 = por %p233, %p234
      %p236 = scmp.ne.s32.totalorder %s228, %s230
      %p237 = scmp.eq.s32.totalorder %s31, 1
      %p238 = por %p236, %p237
      %p239 = scmp.ne.s32.totalorder %s230, %s231
      %p240 = scmp.eq.s32.totalorder %s31, 0
      %p241 = por %p239, %p240
      %p242 = scmp.ne.s32.totalorder %s230, %s231
      %p243 = scmp.eq.s32.totalorder %s32, 1
      %p244 = por %p242, %p243
      %p246 = scmp.ne.s32.totalorder %s231, %s245
      %p247 = scmp.eq.s32.totalorder %s32, 0
      %p248 = por %p246, %p247
      %s250 = sadd.s32 %s249, 1
      %p253 = scmp.eq.s32.totalorder %s26, 1
      %p254 = scmp.ne.s32.totalorder %s249, %s251
      %p255 = scmp.eq.s32.totalorder %s26, 0
      %p256 = por %p254, %p255
      %p257 = scmp.ne.s32.totalorder %s249, %s251
      %p258 = scmp.eq.s32.totalorder %s31, 1
      %p259 = por %p257, %p258
      %p260 = scmp.ne.s32.totalorder %s251, %s252
      %p261 = scmp.eq.s32.totalorder %s31, 0
      %p262 = por %p260, %p261
      %p263 = scmp.ne.s32.totalorder %s251, %s252
      %p264 = scmp.eq.s32.totalorder %s32, 1
      %p265 = por %p263, %p264
      %p267 = scmp.ne.s32.totalorder %s252, %s266
      %p268 = scmp.eq.s32.totalorder %s32, 0
      %p269 = por %p267, %p268
      %s271 = sadd.s32 %s270, 1
      %p274 = scmp.eq.s32.totalorder %s26, 1
      %p275 = scmp.ne.s32.totalorder %s270, %s272
      %p276 = scmp.eq.s32.totalorder %s26, 0
      %p277 = por %p275, %p276
      %p278 = scmp.ne.s32.totalorder %s270, %s272
      %p279 = scmp.eq.s32.totalorder %s31, 1
      %p280 = por %p278, %p279
      %p281 = scmp.ne.s32.totalorder %s272, %s273
      %p282 = scmp.eq.s32.totalorder %s31, 0
      %p283 = por %p281, %p282
      %p284 = scmp.ne.s32.totalorder %s272, %s273
      %p285 = scmp.eq.s32.totalorder %s32, 1
      %p286 = por %p284, %p285
      %p288 = scmp.ne.s32.totalorder %s273, %s287
      %p289 = scmp.eq.s32.totalorder %s32, 0
      %p290 = por %p288, %p289
      %s292 = sadd.s32 %s291, 1
      %p295 = scmp.eq.s32.totalorder %s26, 1
      %p296 = scmp.ne.s32.totalorder %s291, %s293
      %p297 = scmp.eq.s32.totalorder %s26, 0
      %p298 = por %p296, %p297
      %p299 = scmp.ne.s32.totalorder %s291, %s293
      %p300 = scmp.eq.s32.totalorder %s31, 1
      %p301 = por %p299, %p300
      %p302 = scmp.ne.s32.totalorder %s293, %s294
      %p303 = scmp.eq.s32.totalorder %s31, 0
      %p304 = por %p302, %p303
      %p305 = scmp.ne.s32.totalorder %s293, %s294
      %p306 = scmp.eq.s32.totalorder %s32, 1
      %p307 = por %p305, %p306
      %p309 = scmp.ne.s32.totalorder %s294, %s308
      %p310 = scmp.eq.s32.totalorder %s32, 0
      %p311 = por %p309, %p310
      %s313 = sadd.s32 %s312, 1
      %p316 = scmp.eq.s32.totalorder %s26, 1
      %p317 = scmp.ne.s32.totalorder %s312, %s314
      %p318 = scmp.eq.s32.totalorder %s26, 0
      %p319 = por %p317, %p318
      %p320 = scmp.ne.s32.totalorder %s312, %s314
      %p321 = scmp.eq.s32.totalorder %s31, 1
      %p322 = por %p320, %p321
      %p323 = scmp.ne.s32.totalorder %s314, %s315
      %p324 = scmp.eq.s32.totalorder %s31, 0
      %p325 = por %p323, %p324
      %p326 = scmp.ne.s32.totalorder %s314, %s315
      %p327 = scmp.eq.s32.totalorder %s32, 1
      %p328 = por %p326, %p327
      %p330 = scmp.ne.s32.totalorder %s315, %s329
      %p331 = scmp.eq.s32.totalorder %s32, 0
      %p332 = por %p330, %p331
      %s334 = sadd.s32 %s333, 1
      %p337 = scmp.eq.s32.totalorder %s26, 1
      %p338 = scmp.ne.s32.totalorder %s333, %s335
      %p339 = scmp.eq.s32.totalorder %s26, 0
      %p340 = por %p338, %p339
      %p341 = scmp.ne.s32.totalorder %s333, %s335
      %p342 = scmp.eq.s32.totalorder %s31, 1
      %p343 = por %p341, %p342
      %p344 = scmp.ne.s32.totalorder %s335, %s336
      %p345 = scmp.eq.s32.totalorder %s31, 0
      %p346 = por %p344, %p345
      %p347 = scmp.ne.s32.totalorder %s335, %s336
      %p348 = scmp.eq.s32.totalorder %s32, 1
      %p349 = por %p347, %p348
      %p351 = scmp.ne.s32.totalorder %s336, %s350
      %p352 = scmp.eq.s32.totalorder %s32, 0
      %p353 = por %p351, %p352
      %s355 = sadd.s32 %s354, 1
      %p358 = scmp.eq.s32.totalorder %s26, 1
      %p359 = scmp.ne.s32.totalorder %s354, %s356
      %p360 = scmp.eq.s32.totalorder %s26, 0
      %p361 = por %p359, %p360
      %p362 = scmp.ne.s32.totalorder %s354, %s356
      %p363 = scmp.eq.s32.totalorder %s31, 1
      %p364 = por %p362, %p363
      %p365 = scmp.ne.s32.totalorder %s356, %s357
      %p366 = scmp.eq.s32.totalorder %s31, 0
      %p367 = por %p365, %p366
      %p368 = scmp.ne.s32.totalorder %s356, %s357
      %p369 = scmp.eq.s32.totalorder %s32, 1
      %p370 = por %p368, %p369
      %p372 = scmp.ne.s32.totalorder %s357, %s371
      %p373 = scmp.eq.s32.totalorder %s32, 0
      %p374 = por %p372, %p373
      %s376 = sadd.s32 %s375, 1
      %p379 = scmp.eq.s32.totalorder %s26, 1
      %p380 = scmp.ne.s32.totalorder %s375, %s377
      %p381 = scmp.eq.s32.totalorder %s26, 0
      %p382 = por %p380, %p381
      %p383 = scmp.ne.s32.totalorder %s375, %s377
      %p384 = scmp.eq.s32.totalorder %s31, 1
      %p385 = por %p383, %p384
      %p386 = scmp.ne.s32.totalorder %s377, %s378
      %p387 = scmp.eq.s32.totalorder %s31, 0
      %p388 = por %p386, %p387
      %p389 = scmp.ne.s32.totalorder %s377, %s378
      %p390 = scmp.eq.s32.totalorder %s32, 1
      %p391 = por %p389, %p390
      %p393 = scmp.ne.s32.totalorder %s378, %s392
      %p394 = scmp.eq.s32.totalorder %s32, 0
      %p395 = por %p393, %p394
      %s396 = ssub.s32 %s26, %s33
      %p397 = scmp.eq.s32.totalorder %s396, 0
      %s399 = sadd.s32 %s398, 1
      %s400 = scalar_select %p397, %s398, %s399
      %p403 = pneg %p397
      %p404 = scmp.eq.s32.totalorder %s26, 1
      %p405 = por %p403, %p404
      %p406 = scmp.ne.s32.totalorder %s398, %s401
      %p407 = scmp.eq.s32.totalorder %s26, 0
      %p408 = por %p406, %p407
      %p409 = scmp.ne.s32.totalorder %s398, %s401
      %p410 = scmp.eq.s32.totalorder %s31, 1
      %p411 = por %p409, %p410
      %p412 = scmp.ne.s32.totalorder %s401, %s402
      %p413 = scmp.eq.s32.totalorder %s31, 0
      %p414 = por %p412, %p413
      %p415 = scmp.ne.s32.totalorder %s401, %s402
      %p416 = scmp.eq.s32.totalorder %s32, 1
      %p417 = por %p415, %p416
      %p419 = scmp.ne.s32.totalorder %s402, %s418
      %p420 = scmp.eq.s32.totalorder %s32, 0
      %p421 = por %p419, %p420
      %p422 = scmp.le.s32.totalorder 1, %s26
      %p423 = scmp.lt.s32.totalorder %s26, 3
      %p424 = pnand %p422, %p423
      %p425 = pneg %p424
      // Predicated region
      $region9: #{gpt2_block.1} parent=5 // pred_check
        _
      $region10: #{gpt2_block.1} parent=5 // pred_check_branch
        %427 = sbr.rel (%p424) target = $region12
      $region11: #{gpt2_block.1} parent=5 // pred_region
        %s428 = ssub.s32 %s26, 1
        // Predicated region
        $region13: #{gpt2_block.1} parent=11 // pred_check
          %p429 = pneg %p73
        $region14: #{gpt2_block.1} parent=11 // pred_check_branch
          %431 = sbr.rel (%p429) target = $region16
        $region15: #{gpt2_block.1} parent=11 // pred_region
          _
        $region16: #{gpt2_block.1} parent=11 // pred_fallthru
          _
        // Predicated region
        $region17: #{gpt2_block.1} parent=11 // pred_check
          %p432 = pneg %p94
        $region18: #{gpt2_block.1} parent=11 // pred_check_branch
          %434 = sbr.rel (%p432) target = $region20
        $region19: #{gpt2_block.1} parent=11 // pred_region
          _
        $region20: #{gpt2_block.1} parent=11 // pred_fallthru
          _
        // Predicated region
        $region21: #{gpt2_block.1} parent=11 // pred_check
          %p435 = pneg %p115
        $region22: #{gpt2_block.1} parent=11 // pred_check_branch
          %437 = sbr.rel (%p435) target = $region24
        $region23: #{gpt2_block.1} parent=11 // pred_region
          _
        $region24: #{gpt2_block.1} parent=11 // pred_fallthru
          _
        // Predicated region
        $region25: #{gpt2_block.1} parent=11 // pred_check
          %p438 = pneg %p136
        $region26: #{gpt2_block.1} parent=11 // pred_check_branch
          %440 = sbr.rel (%p438) target = $region28
        $region27: #{gpt2_block.1} parent=11 // pred_region
          _
        $region28: #{gpt2_block.1} parent=11 // pred_fallthru
          _
        // Predicated region
        $region29: #{gpt2_block.1} parent=11 // pred_check
          %p441 = pneg %p157
        $region30: #{gpt2_block.1} parent=11 // pred_check_branch
          %443 = sbr.rel (%p441) target = $region32
        $region31: #{gpt2_block.1} parent=11 // pred_region
          _
        $region32: #{gpt2_block.1} parent=11 // pred_fallthru
          _
        // Predicated region
        $region33: #{gpt2_block.1} parent=11 // pred_check
          %p444 = pneg %p178
        $region34: #{gpt2_block.1} parent=11 // pred_check_branch
          %446 = sbr.rel (%p444) target = $region36
        $region35: #{gpt2_block.1} parent=11 // pred_region
          _
        $region36: #{gpt2_block.1} parent=11 // pred_fallthru
          _
        // Predicated region
        $region37: #{gpt2_block.1} parent=11 // pred_check
          %p447 = pneg %p199
        $region38: #{gpt2_block.1} parent=11 // pred_check_branch
          %449 = sbr.rel (%p447) target = $region40
        $region39: #{gpt2_block.1} parent=11 // pred_region
          _
        $region40: #{gpt2_block.1} parent=11 // pred_fallthru
          _
        // Predicated region
        $region41: #{gpt2_block.1} parent=11 // pred_check
          %p450 = pneg %p220
        $region42: #{gpt2_block.1} parent=11 // pred_check_branch
          %452 = sbr.rel (%p450) target = $region44
        $region43: #{gpt2_block.1} parent=11 // pred_region
          _
        $region44: #{gpt2_block.1} parent=11 // pred_fallthru
          _
        // Predicated region
        $region45: #{gpt2_block.1} parent=11 // pred_check
          %p453 = pneg %p241
        $region46: #{gpt2_block.1} parent=11 // pred_check_branch
          %455 = sbr.rel (%p453) target = $region48
        $region47: #{gpt2_block.1} parent=11 // pred_region
          _
        $region48: #{gpt2_block.1} parent=11 // pred_fallthru
          _
        // Predicated region
        $region49: #{gpt2_block.1} parent=11 // pred_check
          %p456 = pneg %p262
        $region50: #{gpt2_block.1} parent=11 // pred_check_branch
          %458 = sbr.rel (%p456) target = $region52
        $region51: #{gpt2_block.1} parent=11 // pred_region
          _
        $region52: #{gpt2_block.1} parent=11 // pred_fallthru
          _
        // Predicated region
        $region53: #{gpt2_block.1} parent=11 // pred_check
          %p459 = pneg %p283
        $region54: #{gpt2_block.1} parent=11 // pred_check_branch
          %461 = sbr.rel (%p459) target = $region56
        $region55: #{gpt2_block.1} parent=11 // pred_region
          _
        $region56: #{gpt2_block.1} parent=11 // pred_fallthru
          _
        // Predicated region
        $region57: #{gpt2_block.1} parent=11 // pred_check
          %p462 = pneg %p304
        $region58: #{gpt2_block.1} parent=11 // pred_check_branch
          %464 = sbr.rel (%p462) target = $region60
        $region59: #{gpt2_block.1} parent=11 // pred_region
          _
        $region60: #{gpt2_block.1} parent=11 // pred_fallthru
          _
        // Predicated region
        $region61: #{gpt2_block.1} parent=11 // pred_check
          %p465 = pneg %p325
        $region62: #{gpt2_block.1} parent=11 // pred_check_branch
          %467 = sbr.rel (%p465) target = $region64
        $region63: #{gpt2_block.1} parent=11 // pred_region
          _
        $region64: #{gpt2_block.1} parent=11 // pred_fallthru
          _
        // Predicated region
        $region65: #{gpt2_block.1} parent=11 // pred_check
          %p468 = pneg %p346
        $region66: #{gpt2_block.1} parent=11 // pred_check_branch
          %470 = sbr.rel (%p468) target = $region68
        $region67: #{gpt2_block.1} parent=11 // pred_region
          _
        $region68: #{gpt2_block.1} parent=11 // pred_fallthru
          _
        // Predicated region
        $region69: #{gpt2_block.1} parent=11 // pred_check
          %p471 = pneg %p367
        $region70: #{gpt2_block.1} parent=11 // pred_check_branch
          %473 = sbr.rel (%p471) target = $region72
        $region71: #{gpt2_block.1} parent=11 // pred_region
          _
        $region72: #{gpt2_block.1} parent=11 // pred_fallthru
          _
        // Predicated region
        $region73: #{gpt2_block.1} parent=11 // pred_check
          %p474 = pneg %p388
        $region74: #{gpt2_block.1} parent=11 // pred_check_branch
          %476 = sbr.rel (%p474) target = $region76
        $region75: #{gpt2_block.1} parent=11 // pred_region
          _
        $region76: #{gpt2_block.1} parent=11 // pred_fallthru
          _
      $region12: #{gpt2_block.1} parent=5 // pred_fallthru
        _
      %p477 = scmp.lt.s32.totalorder %s26, 2
      // Predicated region
      $region77: #{gpt2_block.1} parent=5 // pred_check
        %p478 = pneg %p477
      $region78: #{gpt2_block.1} parent=5 // pred_check_branch
        %480 = sbr.rel (%p478) target = $region80
      $region79: #{gpt2_block.1} parent=5 // pred_region
        // Predicated region
        $region81: #{gpt2_block.1} parent=79 // pred_check
          %p481 = pneg %p46
        $region82: #{gpt2_block.1} parent=79 // pred_check_branch
          %483 = sbr.rel (%p481) target = $region84
        $region83: #{gpt2_block.1} parent=79 // pred_region
          %p484 = scmp.lt.s32.totalorder %s26, 1
          %s485 = scalar_select %p484, %s26, 1
          %s486 = smul.addr %s485, 8
          %s487 = scalar_lea.vmem %s0, %s486
        $region84: #{gpt2_block.1} parent=79 // pred_fallthru
          _
      $region80: #{gpt2_block.1} parent=5 // pred_fallthru
        _
      %p488 = scmp.le.s32.totalorder 1, %s26
      %p489 = scmp.lt.s32.totalorder %s26, 3
      %p490 = pnand %p488, %p489
      %p491 = pneg %p490
      // Predicated region
      $region85: #{gpt2_block.1} parent=5 // pred_check
        _
      $region86: #{gpt2_block.1} parent=5 // pred_check_branch
        %493 = sbr.rel (%p490) target = $region88
      $region87: #{gpt2_block.1} parent=5 // pred_region
        %s494 = ssub.s32 %s26, 1
        %p495 = scmp.lt.s32.totalorder %s31, 1
        %s496 = scalar_select %p495, %s31, 1
        %s497 = smul.addr %s496, 8
        %s498 = scalar_lea.vmem %s0, %s497
        %p499 = pneg %p52
        %p500 = pneg %p49
        %p501 = pneg %p73
        %p502 = pneg %p70
        %p503 = pneg %p94
        %p504 = pneg %p91
        %p505 = pneg %p115
        %p506 = pneg %p112
        %p507 = pneg %p136
        %p508 = pneg %p133
        %p509 = pneg %p157
        %p510 = pneg %p154
        %p511 = pneg %p178
        %p512 = pneg %p175
        %p513 = pneg %p199
        %p514 = pneg %p196
        %p515 = pneg %p220
        %p516 = pneg %p217
        %p517 = pneg %p241
        %p518 = pneg %p238
        %p519 = pneg %p262
        %p520 = pneg %p259
        %p521 = pneg %p283
        %p522 = pneg %p280
        %p523 = pneg %p304
        %p524 = pneg %p301
        %p525 = pneg %p325
        %p526 = pneg %p322
        %p527 = pneg %p346
        %p528 = pneg %p343
        %p529 = pneg %p367
        %p530 = pneg %p364
        %p531 = pneg %p388
        %p532 = pneg %p385
        %p533 = pneg %p414
        %p534 = pneg %p411
        %s535 = sand.u32 %s401, 1
        %s536 = scalar_lea.sflag [#allocation3], %s535
        %s537 = sand.u32 %s401, 1
        %s538 = smul.addr %s537, 8
        %s539 = scalar_lea.vmem [#allocation2], %s538
        %p540 = scmp.lt.s32.totalorder %s31, 1
        %s541 = scalar_select %p540, %s31, 1
        %s542 = smul.addr %s541, 8
        %s543 = scalar_lea.vmem %s0, %s542
        %v545 = vld [vmem:[%s543] sm:$0xff]
        %v546 = vld [vmem:[%s1] sm:$0x1]
        %v547 = vld [vmem:[%s2] sm:$0x1]
        %vm548 = vcmask 261120
        %v549 = vsel %vm548, %v545, 0.0
        %550 = vadd.xlane.f32.xlu0 %v549
        %v551 = vpop.xlane.xlu0 %550
        %v552 = vrcp.pop 32.0
        %v553 = vmul.f32 %v551, %v552
        %v554 = vsub.f32 %v545, %v553
        %v555 = vmul.f32 %v554, %v554
        %v556 = vsel %vm548, %v555, 0.0
        %557 = vadd.xlane.f32.xlu0 %v556
        %v558 = vpop.xlane.xlu0 %557
        %v559 = vmul.f32 %v558, %v552
        %v560 = vadd.f32 %v559, 1e-05
        %v561 = vrsqrt.pop %v560
        %v562 = vmul.f32 %v554, %v561
        %v564 = vlaneseq
        %v565 = vshrl.u32 %v564, 7
        %v566 = vsub.s32 0, %v565
        %v567 = vrot.slane %v546, %v566
        %v569 = vmul.f32 %v562, %v567
        %v571 = vlaneseq
        %v572 = vshrl.u32 %v571, 7
        %v573 = vsub.s32 0, %v572
        %v574 = vrot.slane %v547, %v573
        %v576 = vadd.f32 %v569, %v574
        %v577 = vpack.c.bf16 %v576, %v576
        %v578 = vlaneseq
        %v579 = vshrl.u32 %v578, 7
        %v580 = vlaneseq
        %v581 = vand.u32 %v580, 127
        %vm582 = vcmp.le.s32.totalorder %v581, %v579
        %v583 = vsel %vm582, 0.0, -1e+30
        %v584 = vld [vmem:[%s3] sm:$0xf]
        %v585 = vld [vmem:[%s3 + $0x4] sm:$0xf]
        %v586 = vld [vmem:[%s3 + $0x8] sm:$0xf]
        %v587 = vld [vmem:[%s3 + $0xc] sm:$0xf]
        %v588 = vld [vmem:[%s4] sm:$0x1]
        %v590 = vlaneseq
        %v591 = vshrl.u32 %v590, 7
        %v592 = vsub.s32 0, %v591
        %v593 = vrot.slane %v588, %v592
        %v599 = vunpack.c.l.b16 %v584
        %v600 = vunpack.c.l.b16 %v585
        %v601 = vunpack.c.l.b16 %v586
        %v602 = vunpack.c.l.b16 %v587
        %v603 = vpack.c.b16 %v600, %v599
        %v604 = vpack.c.b16 %v602, %v601
        %v608 = vsel %vm548, %v577, 0
        %610 = vmatprep.subr.bf16.mxu0 0
        %611 = vmatpush1.bf16.msra.mxu0 %v603
        %612 = vmatprep.subr.bf16.mxu0 0
        %613 = vmatpush1.bf16.msra.mxu0 %v604
        %614 = vmatprep.subr.bf16.mxu0 0
        %615 = vmatpush1.bf16.msra.mxu0 0
        %616 = vmatprep.subr.bf16.mxu0 0
        %617 = vmatpush1.bf16.msra.mxu0 0
        %618 = vmatprep.subr.bf16.mxu0 0
        %619 = vmatpush1.bf16.msra.mxu0 0
        %620 = vmatprep.subr.bf16.mxu0 0
        %621 = vmatpush1.bf16.msra.mxu0 0
        %622 = vmatprep.subr.bf16.mxu0 0
        %623 = vmatpush1.bf16.msra.mxu0 0
        %624 = vmatprep.subr.bf16.mxu0 0
        %625 = vmatpush1.bf16.msra.mxu0 0
        %626 = vmatprep.subr.bf16.mxu0 0
        %627 = vmatpush1.bf16.msra.mxu0 0
        %628 = vmatprep.subr.bf16.mxu0 0
        %629 = vmatpush1.bf16.msra.mxu0 0
        %630 = vmatprep.subr.bf16.mxu0 0
        %631 = vmatpush1.bf16.msra.mxu0 0
        %632 = vmatprep.subr.bf16.mxu0 0
        %633 = vmatpush1.bf16.msra.mxu0 0
        %634 = vmatprep.subr.bf16.mxu0 0
        %635 = vmatpush1.bf16.msra.mxu0 0
        %636 = vmatprep.subr.bf16.mxu0 0
        %637 = vmatpush1.bf16.msra.mxu0 0
        %638 = vmatprep.subr.bf16.mxu0 0
        %639 = vmatpush1.bf16.msra.mxu0 0
        %640 = vmatprep.subr.bf16.mxu0 0
        %641 = vmatpush1.bf16.msra.mxu0 0
        %642 = vmatprep.mubr.bf16.mxu0 0
        %643 = vmatmul.mubr.bf16.gmra.mrb[0].mxu0 %v608
        %v644 = vpop.f32.mrb[0].mxu0
        %v645 = vadd.f32 %v593, %v644
        %v646 = vpop.f32.mrb[0].mxu0
        %v647 = vpop.f32.mrb[0].mxu0
        %v648 = vpop.f32.mrb[0].mxu0
        %649 = vdwg.mxu0
        %v650 = vld [vmem:[%s5] sm:$0xf]
        %v651 = vld [vmem:[%s5 + $0x4] sm:$0xf]
        %v652 = vld [vmem:[%s5 + $0x8] sm:$0xf]
        %v653 = vld [vmem:[%s5 + $0xc] sm:$0xf]
        %v654 = vld [vmem:[%s6] sm:$0x1]
        %v656 = vlaneseq
        %v657 = vshrl.u32 %v656, 7
        %v658 = vsub.s32 0, %v657
        %v659 = vrot.slane %v654, %v658
        %v665 = vunpack.c.l.b16 %v650
        %v666 = vunpack.c.l.b16 %v651
        %v667 = vunpack.c.l.b16 %v652
        %v668 = vunpack.c.l.b16 %v653
        %v669 = vpack.c.b16 %v666, %v665
        %v670 = vpack.c.b16 %v668, %v667
        %673 = vmatprep.subr.bf16.mxu0 0
        %674 = vmatpush1.bf16.msra.mxu0 %v669
        %675 = vmatprep.subr.bf16.mxu0 0
        %676 = vmatpush1.bf16.msra.mxu0 %v670
        %677 = vmatprep.subr.bf16.mxu0 0
        %678 = vmatpush1.bf16.msra.mxu0 0
        %679 = vmatprep.subr.bf16.mxu0 0
        %680 = vmatpush1.bf16.msra.mxu0 0
        %681 = vmatprep.subr.bf16.mxu0 0
        %682 = vmatpush1.bf16.msra.mxu0 0
        %683 = vmatprep.subr.bf16.mxu0 0
        %684 = vmatpush1.bf16.msra.mxu0 0
        %685 = vmatprep.subr.bf16.mxu0 0
        %686 = vmatpush1.bf16.msra.mxu0 0
        %687 = vmatprep.subr.bf16.mxu0 0
        %688 = vmatpush1.bf16.msra.mxu0 0
        %689 = vmatprep.subr.bf16.mxu0 0
        %690 = vmatpush1.bf16.msra.mxu0 0
        %691 = vmatprep.subr.bf16.mxu0 0
        %692 = vmatpush1.bf16.msra.mxu0 0
        %693 = vmatprep.subr.bf16.mxu0 0
        %694 = vmatpush1.bf16.msra.mxu0 0
        %695 = vmatprep.subr.bf16.mxu0 0
        %696 = vmatpush1.bf16.msra.mxu0 0
        %697 = vmatprep.subr.bf16.mxu0 0
        %698 = vmatpush1.bf16.msra.mxu0 0
        %699 = vmatprep.subr.bf16.mxu0 0
        %700 = vmatpush1.bf16.msra.mxu0 0
        %701 = vmatprep.subr.bf16.mxu0 0
        %702 = vmatpush1.bf16.msra.mxu0 0
        %703 = vmatprep.subr.bf16.mxu0 0
        %704 = vmatpush1.bf16.msra.mxu0 0
        %705 = vmatprep.mubr.bf16.mxu0 0
        %706 = vmatmul.mubr.bf16.gmra.mrb[0].mxu0 %v608
        %v707 = vpop.f32.mrb[0].mxu0
        %v708 = vadd.f32 %v659, %v707
        %v709 = vpop.f32.mrb[0].mxu0
        %v710 = vpop.f32.mrb[0].mxu0
        %v711 = vpop.f32.mrb[0].mxu0
        %712 = vdwg.mxu0
        %v713 = vld [vmem:[%s7] sm:$0xf]
        %v714 = vld [vmem:[%s7 + $0x4] sm:$0xf]
        %v715 = vld [vmem:[%s7 + $0x8] sm:$0xf]
        %v716 = vld [vmem:[%s7 + $0xc] sm:$0xf]
        %v717 = vld [vmem:[%s8] sm:$0x1]
        %v719 = vlaneseq
        %v720 = vshrl.u32 %v719, 7
        %v721 = vsub.s32 0, %v720
        %v722 = vrot.slane %v717, %v721
        %v728 = vunpack.c.l.b16 %v713
        %v729 = vunpack.c.l.b16 %v714
        %v730 = vunpack.c.l.b16 %v715
        %v731 = vunpack.c.l.b16 %v716
        %v732 = vpack.c.b16 %v729, %v728
        %v733 = vpack.c.b16 %v731, %v730
        %736 = vmatprep.subr.bf16.mxu0 0
        %737 = vmatpush1.bf16.msra.mxu0 %v732
        %738 = vmatprep.subr.bf16.mxu0 0
        %739 = vmatpush1.bf16.msra.mxu0 %v733
        %740 = vmatprep.subr.bf16.mxu0 0
        %741 = vmatpush1.bf16.msra.mxu0 0
        %742 = vmatprep.subr.bf16.mxu0 0
        %743 = vmatpush1.bf16.msra.mxu0 0
        %744 = vmatprep.subr.bf16.mxu0 0
        %745 = vmatpush1.bf16.msra.mxu0 0
        %746 = vmatprep.subr.bf16.mxu0 0
        %747 = vmatpush1.bf16.msra.mxu0 0
        %748 = vmatprep.subr.bf16.mxu0 0
        %749 = vmatpush1.bf16.msra.mxu0 0
        %750 = vmatprep.subr.bf16.mxu0 0
        %751 = vmatpush1.bf16.msra.mxu0 0
        %752 = vmatprep.subr.bf16.mxu0 0
        %753 = vmatpush1.bf16.msra.mxu0 0
        %754 = vmatprep.subr.bf16.mxu0 0
        %755 = vmatpush1.bf16.msra.mxu0 0
        %756 = vmatprep.subr.bf16.mxu0 0
        %757 = vmatpush1.bf16.msra.mxu0 0
        %758 = vmatprep.subr.bf16.mxu0 0
        %759 = vmatpush1.bf16.msra.mxu0 0
        %760 = vmatprep.subr.bf16.mxu0 0
        %761 = vmatpush1.bf16.msra.mxu0 0
        %762 = vmatprep.subr.bf16.mxu0 0
        %763 = vmatpush1.bf16.msra.mxu0 0
        %764 = vmatprep.subr.bf16.mxu0 0
        %765 = vmatpush1.bf16.msra.mxu0 0
        %766 = vmatprep.subr.bf16.mxu0 0
        %767 = vmatpush1.bf16.msra.mxu0 0
        %768 = vmatprep.mubr.bf16.mxu0 0
        %769 = vmatmul.mubr.bf16.gmra.mrb[0].mxu0 %v608
        %v770 = vpop.f32.mrb[0].mxu0
        %v771 = vadd.f32 %v722, %v770
        %v772 = vpop.f32.mrb[0].mxu0
        %v773 = vpop.f32.mrb[0].mxu0
        %v774 = vpop.f32.mrb[0].mxu0
        %775 = vdwg.mxu0
        %v776 = vpack.c.bf16 %v645, %v645
        %v777 = vpack.c.bf16 %v708, %v708
        %vm778 = vcmask 64512
        %v780 = vsel %vm778, %v776, 0
        %v783 = vsel %vm778, %v777, 0
        %785 = vmatprep.subr.bf16.mxu0 0
        %786 = vmatpush1.bf16.xpose.msra.mxu0 %v783
        %787 = vmatprep.subr.bf16.mxu0 0
        %788 = vmatpush1.bf16.xpose.msra.mxu0 0
        %789 = vmatprep.subr.bf16.mxu0 0
        %790 = vmatpush1.bf16.xpose.msra.mxu0 0
        %791 = vmatprep.subr.bf16.mxu0 0
        %792 = vmatpush1.bf16.xpose.msra.mxu0 0
        %793 = vmatprep.subr.bf16.mxu0 0
        %794 = vmatpush1.bf16.xpose.msra.mxu0 0
        %795 = vmatprep.subr.bf16.mxu0 0
        %796 = vmatpush1.bf16.xpose.msra.mxu0 0
        %797 = vmatprep.subr.bf16.mxu0 0
        %798 = vmatpush1.bf16.xpose.msra.mxu0 0
        %799 = vmatprep.subr.bf16.mxu0 0
        %800 = vmatpush1.bf16.xpose.msra.mxu0 0
        %801 = vmatprep.subr.bf16.mxu0 0
        %802 = vmatpush1.bf16.xpose.msra.mxu0 0
        %803 = vmatprep.subr.bf16.mxu0 0
        %804 = vmatpush1.bf16.xpose.msra.mxu0 0
        %805 = vmatprep.subr.bf16.mxu0 0
        %806 = vmatpush1.bf16.xpose.msra.mxu0 0
        %807 = vmatprep.subr.bf16.mxu0 0
        %808 = vmatpush1.bf16.xpose.msra.mxu0 0
        %809 = vmatprep.subr.bf16.mxu0 0
        %810 = vmatpush1.bf16.xpose.msra.mxu0 0
        %811 = vmatprep.subr.bf16.mxu0 0
        %812 = vmatpush1.bf16.xpose.msra.mxu0 0
        %813 = vmatprep.subr.bf16.mxu0 0
        %814 = vmatpush1.bf16.xpose.msra.mxu0 0
        %815 = vmatprep.subr.bf16.mxu0 0
        %816 = vmatpush1.bf16.xpose.msra.mxu0 0
        %817 = vmatprep.mubr.bf16.mxu0 0
        %818 = vmatmul.mubr.bf16.gmra.mrb[0].mxu0 %v780
        %v819 = vpop.f32.mrb[0].mxu0
        %v820 = vadd.f32 %v583, %v819
        %v821 = vpop.f32.mrb[0].mxu0
        %v822 = vpop.f32.mrb[0].mxu0
        %v823 = vpop.f32.mrb[0].mxu0
        %824 = vdwg.mxu0
        %v825 = vsel %vm778, %v820, -inf
        %826 = vmax.xlane.f32.xlu0 %v825
        %v827 = vpop.xlane.xlu0 %826
        %v828 = vsub.f32 %v820, %v827
        %v829 = vmul.f32 %v828, 1.442695
        %v830 = vpow.pop %v829
        %v831 = vsel %vm778, %v830, 0.0
        %832 = vadd.xlane.f32.xlu0 %v831
        %v833 = vpop.xlane.xlu0 %832
        %v834 = vrcp.pop %v833
        %v835 = vmul.f32 %v830, %v834
        %v836 = vpack.c.bf16 %v835, %v835
        %v837 = vpack.c.bf16 %v771, %v771
        %v839 = vsel %vm778, %v836, 0
        %vm841 = vcmask 1043456
        %v843 = vsel %vm841, %v837, 0
        %845 = vmatprep.subr.bf16.mxu0 0
        %846 = vmatpush1.bf16.msra.mxu0 %v843
        %847 = vmatprep.subr.bf16.mxu0 0
        %848 = vmatpush1.bf16.msra.mxu0 0
        %849 = vmatprep.subr.bf16.mxu0 0
        %850 = vmatpush1.bf16.msra.mxu0 0
        %851 = vmatprep.subr.bf16.mxu0 0
        %852 = vmatpush1.bf16.msra.mxu0 0
        %853 = vmatprep.subr.bf16.mxu0 0
        %854 = vmatpush1.bf16.msra.mxu0 0
        %855 = vmatprep.subr.bf16.mxu0 0
        %856 = vmatpush1.bf16.msra.mxu0 0
        %857 = vmatprep.subr.bf16.mxu0 0
        %858 = vmatpush1.bf16.msra.mxu0 0
        %859 = vmatprep.subr.bf16.mxu0 0
        %860 = vmatpush1.bf16.msra.mxu0 0
        %861 = vmatprep.subr.bf16.mxu0 0
        %862 = vmatpush1.bf16.msra.mxu0 0
        %863 = vmatprep.subr.bf16.mxu0 0
        %864 = vmatpush1.bf16.msra.mxu0 0
        %865 = vmatprep.subr.bf16.mxu0 0
        %866 = vmatpush1.bf16.msra.mxu0 0
        %867 = vmatprep.subr.bf16.mxu0 0
        %868 = vmatpush1.bf16.msra.mxu0 0
        %869 = vmatprep.subr.bf16.mxu0 0
        %870 = vmatpush1.bf16.msra.mxu0 0
        %871 = vmatprep.subr.bf16.mxu0 0
        %872 = vmatpush1.bf16.msra.mxu0 0
        %873 = vmatprep.subr.bf16.mxu0 0
        %874 = vmatpush1.bf16.msra.mxu0 0
        %875 = vmatprep.subr.bf16.mxu0 0
        %876 = vmatpush1.bf16.msra.mxu0 0
        %877 = vmatprep.mubr.bf16.mxu0 0
        %878 = vmatmul.mubr.bf16.gmra.mrb[0].mxu0 %v839
        %v879 = vpop.f32.mrb[0].mxu0
        %v880 = vadd.f32 0.0, %v879
        %v881 = vpop.f32.mrb[0].mxu0
        %v882 = vpop.f32.mrb[0].mxu0
        %v883 = vpop.f32.mrb[0].mxu0
        %884 = vdwg.mxu0
        %v885 = vpack.c.bf16 %v880, %v880
        %v886 = vld [vmem:[%s9] sm:$0xf]
        %s887 = scalar_lea.vmem %s3, 16
        %v888 = vld [vmem:[%s887] sm:$0xf]
        %v889 = vld [vmem:[%s887 + $0x4] sm:$0xf]
        %v890 = vld [vmem:[%s887 + $0x8] sm:$0xf]
        %v891 = vld [vmem:[%s887 + $0xc] sm:$0xf]
        %s892 = scalar_lea.vmem %s4, 1
        %v893 = vld [vmem:[%s892] sm:$0x1]
        %v895 = vlaneseq
        %v896 = vshrl.u32 %v895, 7
        %v897 = vsub.s32 0, %v896
        %v898 = vrot.slane %v893, %v897
        %v904 = vunpack.c.l.b16 %v888
        %v905 = vunpack.c.l.b16 %v889
        %v906 = vunpack.c.l.b16 %v890
        %v907 = vunpack.c.l.b16 %v891
        %v908 = vpack.c.b16 %v905, %v904
        %v909 = vpack.c.b16 %v907, %v906
        %912 = vmatprep.subr.bf16.mxu0 0
        %913 = vmatpush1.bf16.msra.mxu0 %v908
        %914 = vmatprep.subr.bf16.mxu0 0
        %915 = vmatpush1.bf16.msra.mxu0 %v909
        %916 = vmatprep.subr.bf16.mxu0 0
        %917 = vmatpush1.bf16.msra.mxu0 0
        %918 = vmatprep.subr.bf16.mxu0 0
        %919 = vmatpush1.bf16.msra.mxu0 0
        %920 = vmatprep.subr.bf16.mxu0 0
        %921 = vmatpush1.bf16.msra.mxu0 0
        %922 = vmatprep.subr.bf16.mxu0 0
        %923 = vmatpush1.bf16.msra.mxu0 0
        %924 = vmatprep.subr.bf16.mxu0 0
        %925 = vmatpush1.bf16.msra.mxu0 0
        %926 = vmatprep.subr.bf16.mxu0 0
        %927 = vmatpush1.bf16.msra.mxu0 0
        %928 = vmatprep.subr.bf16.mxu0 0
        %929 = vmatpush1.bf16.msra.mxu0 0
        %930 = vmatprep.subr.bf16.mxu0 0
        %931 = vmatpush1.bf16.msra.mxu0 0
        %932 = vmatprep.subr.bf16.mxu0 0
        %933 = vmatpush1.bf16.msra.mxu0 0
        %934 = vmatprep.subr.bf16.mxu0 0
        %935 = vmatpush1.bf16.msra.mxu0 0
        %936 = vmatprep.subr.bf16.mxu0 0
        %937 = vmatpush1.bf16.msra.mxu0 0
        %938 = vmatprep.subr.bf16.mxu0 0
        %939 = vmatpush1.bf16.msra.mxu0 0
        %940 = vmatprep.subr.bf16.mxu0 0
        %941 = vmatpush1.bf16.msra.mxu0 0
        %942 = vmatprep.subr.bf16.mxu0 0
        %943 = vmatpush1.bf16.msra.mxu0 0
        %944 = vmatprep.mubr.bf16.mxu0 0
        %945 = vmatmul.mubr.bf16.gmra.mrb[0].mxu0 %v608
        %v946 = vpop.f32.mrb[0].mxu0
        %v947 = vadd.f32 %v898, %v946
        %v948 = vpop.f32.mrb[0].mxu0
        %v949 = vpop.f32.mrb[0].mxu0
        %v950 = vpop.f32.mrb[0].mxu0
        %951 = vdwg.mxu0
        %s952 = scalar_lea.vmem %s5, 16
        %v953 = vld [vmem:[%s952] sm:$0xf]
        %v954 = vld [vmem:[%s952 + $0x4] sm:$0xf]
        %v955 = vld [vmem:[%s952 + $0x8] sm:$0xf]
        %v956 = vld [vmem:[%s952 + $0xc] sm:$0xf]
        %s957 = scalar_lea.vmem %s6, 1
        %v958 = vld [vmem:[%s957] sm:$0x1]
        %v960 = vlaneseq
        %v961 = vshrl.u32 %v960, 7
        %v962 = vsub.s32 0, %v961
        %v963 = vrot.slane %v958, %v962
        %v969 = vunpack.c.l.b16 %v953
        %v970 = vunpack.c.l.b16 %v954
        %v971 = vunpack.c.l.b16 %v955
        %v972 = vunpack.c.l.b16 %v956
        %v973 = vpack.c.b16 %v970, %v969
        %v974 = vpack.c.b16 %v972, %v971
        %977 = vmatprep.subr.bf16.mxu0 0
        %978 = vmatpush1.bf16.msra.mxu0 %v973
        %979 = vmatprep.subr.bf16.mxu0 0
        %980 = vmatpush1.bf16.msra.mxu0 %v974
        %981 = vmatprep.subr.bf16.mxu0 0
        %982 = vmatpush1.bf16.msra.mxu0 0
        %983 = vmatprep.subr.bf16.mxu0 0
        %984 = vmatpush1.bf16.msra.mxu0 0
        %985 = vmatprep.subr.bf16.mxu0 0
        %986 = vmatpush1.bf16.msra.mxu0 0
        %987 = vmatprep.subr.bf16.mxu0 0
        %988 = vmatpush1.bf16.msra.mxu0 0
        %989 = vmatprep.subr.bf16.mxu0 0
        %990 = vmatpush1.bf16.msra.mxu0 0
        %991 = vmatprep.subr.bf16.mxu0 0
        %992 = vmatpush1.bf16.msra.mxu0 0
        %993 = vmatprep.subr.bf16.mxu0 0
        %994 = vmatpush1.bf16.msra.mxu0 0
        %995 = vmatprep.subr.bf16.mxu0 0
        %996 = vmatpush1.bf16.msra.mxu0 0
        %997 = vmatprep.subr.bf16.mxu0 0
        %998 = vmatpush1.bf16.msra.mxu0 0
        %999 = vmatprep.subr.bf16.mxu0 0
        %1000 = vmatpush1.bf16.msra.mxu0 0
        %1001 = vmatprep.subr.bf16.mxu0 0
        %1002 = vmatpush1.bf16.msra.mxu0 0
        %1003 = vmatprep.subr.bf16.mxu0 0
        %1004 = vmatpush1.bf16.msra.mxu0 0
        %1005 = vmatprep.subr.bf16.mxu0 0
        %1006 = vmatpush1.bf16.msra.mxu0 0
        %1007 = vmatprep.subr.bf16.mxu0 0
        %1008 = vmatpush1.bf16.msra.mxu0 0
        %1009 = vmatprep.mubr.bf16.mxu0 0
        %1010 = vmatmul.mubr.bf16.gmra.mrb[0].mxu0 %v608
        %v1011 = vpop.f32.mrb[0].mxu0
        %v1012 = vadd.f32 %v963, %v1011
        %v1013 = vpop.f32.mrb[0].mxu0
        %v1014 = vpop.f32.mrb[0].mxu0
        %v1015 = vpop.f32.mrb[0].mxu0
        %1016 = vdwg.mxu0
        %s1017 = scalar_lea.vmem %s7, 16
        %v1018 = vld [vmem:[%s1017] sm:$0xf]
        %v1019 = vld [vmem:[%s1017 + $0x4] sm:$0xf]
        %v1020 = vld [vmem:[%s1017 + $0x8] sm:$0xf]
        %v1021 = vld [vmem:[%s1017 + $0xc] sm:$0xf]
        %s1022 = scalar_lea.vmem %s8, 1
        %v1023 = vld [vmem:[%s1022] sm:$0x1]
        %v1025 = vlaneseq
        %v1026 = vshrl.u32 %v1025, 7
        %v1027 = vsub.s32 0, %v1026
        %v1028 = vrot.slane %v1023, %v1027
        %v1034 = vunpack.c.l.b16 %v1018
        %v1035 = vunpack.c.l.b16 %v1019
        %v1036 = vunpack.c.l.b16 %v1020
        %v1037 = vunpack.c.l.b16 %v1021
        %v1038 = vpack.c.b16 %v1035, %v1034
        %v1039 = vpack.c.b16 %v1037, %v1036
        %1042 = vmatprep.subr.bf16.mxu0 0
        %1043 = vmatpush1.bf16.msra.mxu0 %v1038
        %1044 = vmatprep.subr.bf16.mxu0 0
        %1045 = vmatpush1.bf16.msra.mxu0 %v1039
        %1046 = vmatprep.subr.bf16.mxu0 0
        %1047 = vmatpush1.bf16.msra.mxu0 0
        %1048 = vmatprep.subr.bf16.mxu0 0
        %1049 = vmatpush1.bf16.msra.mxu0 0
        %1050 = vmatprep.subr.bf16.mxu0 0
        %1051 = vmatpush1.bf16.msra.mxu0 0
        %1052 = vmatprep.subr.bf16.mxu0 0
        %1053 = vmatpush1.bf16.msra.mxu0 0
        %1054 = vmatprep.subr.bf16.mxu0 0
        %1055 = vmatpush1.bf16.msra.mxu0 0
        %1056 = vmatprep.subr.bf16.mxu0 0
        %1057 = vmatpush1.bf16.msra.mxu0 0
        %1058 = vmatprep.subr.bf16.mxu0 0
        %1059 = vmatpush1.bf16.msra.mxu0 0
        %1060 = vmatprep.subr.bf16.mxu0 0
        %1061 = vmatpush1.bf16.msra.mxu0 0
        %1062 = vmatprep.subr.bf16.mxu0 0
        %1063 = vmatpush1.bf16.msra.mxu0 0
        %1064 = vmatprep.subr.bf16.mxu0 0
        %1065 = vmatpush1.bf16.msra.mxu0 0
        %1066 = vmatprep.subr.bf16.mxu0 0
        %1067 = vmatpush1.bf16.msra.mxu0 0
        %1068 = vmatprep.subr.bf16.mxu0 0
        %1069 = vmatpush1.bf16.msra.mxu0 0
        %1070 = vmatprep.subr.bf16.mxu0 0
        %1071 = vmatpush1.bf16.msra.mxu0 0
        %1072 = vmatprep.subr.bf16.mxu0 0
        %1073 = vmatpush1.bf16.msra.mxu0 0
        %1074 = vmatprep.mubr.bf16.mxu0 0
        %1075 = vmatmul.mubr.bf16.gmra.mrb[0].mxu0 %v608
        %v1076 = vpop.f32.mrb[0].mxu0
        %v1077 = vadd.f32 %v1028, %v1076
        %v1078 = vpop.f32.mrb[0].mxu0
        %v1079 = vpop.f32.mrb[0].mxu0
        %v1080 = vpop.f32.mrb[0].mxu0
        %1081 = vdwg.mxu0
        %v1082 = vpack.c.bf16 %v947, %v947
        %v1083 = vpack.c.bf16 %v1012, %v1012
        %v1085 = vsel %vm778, %v1082, 0
        %v1088 = vsel %vm778, %v1083, 0
        %1090 = vmatprep.subr.bf16.mxu0 0
        %1091 = vmatpush1.bf16.xpose.msra.mxu0 %v1088
        %1092 = vmatprep.subr.bf16.mxu0 0
        %1093 = vmatpush1.bf16.xpose.msra.mxu0 0
        %1094 = vmatprep.subr.bf16.mxu0 0
        %1095 = vmatpush1.bf16.xpose.msra.mxu0 0
        %1096 = vmatprep.subr.bf16.mxu0 0
        %1097 = vmatpush1.bf16.xpose.msra.mxu0 0
        %1098 = vmatprep.subr.bf16.mxu0 0
        %1099 = vmatpush1.bf16.xpose.msra.mxu0 0
        %1100 = vmatprep.subr.bf16.mxu0 0
        %1101 = vmatpush1.bf16.xpose.msra.mxu0 0
        %1102 = vmatprep.subr.bf16.mxu0 0
        %1103 = vmatpush1.bf16.xpose.msra.mxu0 0
        %1104 = vmatprep.subr.bf16.mxu0 0
        %1105 = vmatpush1.bf16.xpose.msra.mxu0 0
        %1106 = vmatprep.subr.bf16.mxu0 0
        %1107 = vmatpush1.bf16.xpose.msra.mxu0 0
        %1108 = vmatprep.subr.bf16.mxu0 0
        %1109 = vmatpush1.bf16.xpose.msra.mxu0 0
        %1110 = vmatprep.subr.bf16.mxu0 0
        %1111 = vmatpush1.bf16.xpose.msra.mxu0 0
        %1112 = vmatprep.subr.bf16.mxu0 0
        %1113 = vmatpush1.bf16.xpose.msra.mxu0 0
        %1114 = vmatprep.subr.bf16.mxu0 0
        %1115 = vmatpush1.bf16.xpose.msra.mxu0 0
        %1116 = vmatprep.subr.bf16.mxu0 0
        %1117 = vmatpush1.bf16.xpose.msra.mxu0 0
        %1118 = vmatprep.subr.bf16.mxu0 0
        %1119 = vmatpush1.bf16.xpose.msra.mxu0 0
        %1120 = vmatprep.subr.bf16.mxu0 0
        %1121 = vmatpush1.bf16.xpose.msra.mxu0 0
        %1122 = vmatprep.mubr.bf16.mxu0 0
        %1123 = vmatmul.mubr.bf16.gmra.mrb[0].mxu0 %v1085
        %v1124 = vpop.f32.mrb[0].mxu0
        %v1125 = vadd.f32 %v583, %v1124
        %v1126 = vpop.f32.mrb[0].mxu0
        %v1127 = vpop.f32.mrb[0].mxu0
        %v1128 = vpop.f32.mrb[0].mxu0
        %1129 = vdwg.mxu0
        %v1130 = vsel %vm778, %v1125, -inf
        %1131 = vmax.xlane.f32.xlu0 %v1130
        %v1132 = vpop.xlane.xlu0 %1131
        %v1133 = vsub.f32 %v1125, %v1132
        %v1134 = vmul.f32 %v1133, 1.442695
        %v1135 = vpow.pop %v1134
        %v1136 = vsel %vm778, %v1135, 0.0
        %1137 = vadd.xlane.f32.xlu0 %v1136
        %v1138 = vpop.xlane.xlu0 %1137
        %v1139 = vrcp.pop %v1138
        %v1140 = vmul.f32 %v1135, %v1139
        %v1141 = vpack.c.bf16 %v1140, %v1140
        %v1142 = vpack.c.bf16 %v1077, %v1077
        %v1144 = vsel %vm778, %v1141, 0
        %v1147 = vsel %vm841, %v1142, 0
        %1149 = vmatprep.subr.bf16.mxu0 0
        %1150 = vmatpush1.bf16.msra.mxu0 %v1147
        %1151 = vmatprep.subr.bf16.mxu0 0
        %1152 = vmatpush1.bf16.msra.mxu0 0
        %1153 = vmatprep.subr.bf16.mxu0 0
        %1154 = vmatpush1.bf16.msra.mxu0 0
        %1155 = vmatprep.subr.bf16.mxu0 0
        %1156 = vmatpush1.bf16.msra.mxu0 0
        %1157 = vmatprep.subr.bf16.mxu0 0
        %1158 = vmatpush1.bf16.msra.mxu0 0
        %1159 = vmatprep.subr.bf16.mxu0 0
        %1160 = vmatpush1.bf16.msra.mxu0 0
        %1161 = vmatprep.subr.bf16.mxu0 0
        %1162 = vmatpush1.bf16.msra.mxu0 0
        %1163 = vmatprep.subr.bf16.mxu0 0
        %1164 = vmatpush1.bf16.msra.mxu0 0
        %1165 = vmatprep.subr.bf16.mxu0 0
        %1166 = vmatpush1.bf16.msra.mxu0 0
        %1167 = vmatprep.subr.bf16.mxu0 0
        %1168 = vmatpush1.bf16.msra.mxu0 0
        %1169 = vmatprep.subr.bf16.mxu0 0
        %1170 = vmatpush1.bf16.msra.mxu0 0
        %1171 = vmatprep.subr.bf16.mxu0 0
        %1172 = vmatpush1.bf16.msra.mxu0 0
        %1173 = vmatprep.subr.bf16.mxu0 0
        %1174 = vmatpush1.bf16.msra.mxu0 0
        %1175 = vmatprep.subr.bf16.mxu0 0
        %1176 = vmatpush1.bf16.msra.mxu0 0
        %1177 = vmatprep.subr.bf16.mxu0 0
        %1178 = vmatpush1.bf16.msra.mxu0 0
        %1179 = vmatprep.subr.bf16.mxu0 0
        %1180 = vmatpush1.bf16.msra.mxu0 0
        %1181 = vmatprep.mubr.bf16.mxu0 0
        %1182 = vmatmul.mubr.bf16.gmra.mrb[0].mxu0 %v1144
        %v1183 = vpop.f32.mrb[0].mxu0
        %v1184 = vadd.f32 0.0, %v1183
        %v1185 = vpop.f32.mrb[0].mxu0
        %v1186 = vpop.f32.mrb[0].mxu0
        %v1187 = vpop.f32.mrb[0].mxu0
        %1188 = vdwg.mxu0
        %v1189 = vpack.c.bf16 %v1184, %v1184
        %s1190 = scalar_lea.vmem %s9, 4
        %v1191 = vld [vmem:[%s1190] sm:$0xf]
        %v1193 = vsel %vm778, %v1189, 0
        %v1196 = vsel %vm841, %v1191, 0
        %1198 = vmatprep.subr.bf16.mxu0 0
        %1199 = vmatpush1.bf16.msra.mxu0 %v1196
        %1200 = vmatprep.subr.bf16.mxu0 0
        %1201 = vmatpush1.bf16.msra.mxu0 0
        %1202 = vmatprep.subr.bf16.mxu0 0
        %1203 = vmatpush1.bf16.msra.mxu0 0
        %1204 = vmatprep.subr.bf16.mxu0 0
        %1205 = vmatpush1.bf16.msra.mxu0 0
        %1206 = vmatprep.subr.bf16.mxu0 0
        %1207 = vmatpush1.bf16.msra.mxu0 0
        %1208 = vmatprep.subr.bf16.mxu0 0
        %1209 = vmatpush1.bf16.msra.mxu0 0
        %1210 = vmatprep.subr.bf16.mxu0 0
        %1211 = vmatpush1.bf16.msra.mxu0 0
        %1212 = vmatprep.subr.bf16.mxu0 0
        %1213 = vmatpush1.bf16.msra.mxu0 0
        %1214 = vmatprep.subr.bf16.mxu0 0
        %1215 = vmatpush1.bf16.msra.mxu0 0
        %1216 = vmatprep.subr.bf16.mxu0 0
        %1217 = vmatpush1.bf16.msra.mxu0 0
        %1218 = vmatprep.subr.bf16.mxu0 0
        %1219 = vmatpush1.bf16.msra.mxu0 0
        %1220 = vmatprep.subr.bf16.mxu0 0
        %1221 = vmatpush1.bf16.msra.mxu0 0
        %1222 = vmatprep.subr.bf16.mxu0 0
        %1223 = vmatpush1.bf16.msra.mxu0 0
        %1224 = vmatprep.subr.bf16.mxu0 0
        %1225 = vmatpush1.bf16.msra.mxu0 0
        %1226 = vmatprep.subr.bf16.mxu0 0
        %1227 = vmatpush1.bf16.msra.mxu0 0
        %1228 = vmatprep.subr.bf16.mxu0 0
        %1229 = vmatpush1.bf16.msra.mxu0 0
        %1230 = vmatprep.mubr.bf16.mxu0 0
        %1231 = vmatmul.mubr.bf16.gmra.mrb[0].mxu0 %v1193
        %v1232 = vpop.f32.mrb[0].mxu0
        %v1233 = vadd.f32 0.0, %v1232
        %v1234 = vpop.f32.mrb[0].mxu0
        %v1235 = vpop.f32.mrb[0].mxu0
        %v1236 = vpop.f32.mrb[0].mxu0
        %1237 = vdwg.mxu0
        %v1239 = vsel %vm778, %v885, 0
        %v1242 = vsel %vm841, %v886, 0
        %1244 = vmatprep.subr.bf16.mxu0 0
        %1245 = vmatpush1.bf16.msra.mxu0 %v1242
        %1246 = vmatprep.subr.bf16.mxu0 0
        %1247 = vmatpush1.bf16.msra.mxu0 0
        %1248 = vmatprep.subr.bf16.mxu0 0
        %1249 = vmatpush1.bf16.msra.mxu0 0
        %1250 = vmatprep.subr.bf16.mxu0 0
        %1251 = vmatpush1.bf16.msra.mxu0 0
        %1252 = vmatprep.subr.bf16.mxu0 0
        %1253 = vmatpush1.bf16.msra.mxu0 0
        %1254 = vmatprep.subr.bf16.mxu0 0
        %1255 = vmatpush1.bf16.msra.mxu0 0
        %1256 = vmatprep.subr.bf16.mxu0 0
        %1257 = vmatpush1.bf16.msra.mxu0 0
        %1258 = vmatprep.subr.bf16.mxu0 0
        %1259 = vmatpush1.bf16.msra.mxu0 0
        %1260 = vmatprep.subr.bf16.mxu0 0
        %1261 = vmatpush1.bf16.msra.mxu0 0
        %1262 = vmatprep.subr.bf16.mxu0 0
        %1263 = vmatpush1.bf16.msra.mxu0 0
        %1264 = vmatprep.subr.bf16.mxu0 0
        %1265 = vmatpush1.bf16.msra.mxu0 0
        %1266 = vmatprep.subr.bf16.mxu0 0
        %1267 = vmatpush1.bf16.msra.mxu0 0
        %1268 = vmatprep.subr.bf16.mxu0 0
        %1269 = vmatpush1.bf16.msra.mxu0 0
        %1270 = vmatprep.subr.bf16.mxu0 0
        %1271 = vmatpush1.bf16.msra.mxu0 0
        %1272 = vmatprep.subr.bf16.mxu0 0
        %1273 = vmatpush1.bf16.msra.mxu0 0
        %1274 = vmatprep.subr.bf16.mxu0 0
        %1275 = vmatpush1.bf16.msra.mxu0 0
        %1276 = vmatprep.mubr.bf16.mxu0 0
        %1277 = vmatmul.mubr.bf16.gmra.mrb[0].mxu0 %v1239
        %v1278 = vpop.f32.mrb[0].mxu0
        %v1279 = vadd.f32 %v1233, %v1278
        %v1280 = vpop.f32.mrb[0].mxu0
        %v1281 = vpop.f32.mrb[0].mxu0
        %v1282 = vpop.f32.mrb[0].mxu0
        %1283 = vdwg.mxu0
        %s1284 = scalar_lea.vmem %s3, 32
        %v1285 = vld [vmem:[%s1284] sm:$0xf]
        %v1286 = vld [vmem:[%s1284 + $0x4] sm:$0xf]
        %v1287 = vld [vmem:[%s1284 + $0x8] sm:$0xf]
        %v1288 = vld [vmem:[%s1284 + $0xc] sm:$0xf]
        %s1289 = scalar_lea.vmem %s4, 2
        %v1290 = vld [vmem:[%s1289] sm:$0x1]
        %v1292 = vlaneseq
        %v1293 = vshrl.u32 %v1292, 7
        %v1294 = vsub.s32 0, %v1293
        %v1295 = vrot.slane %v1290, %v1294
        %v1301 = vunpack.c.l.b16 %v1285
        %v1302 = vunpack.c.l.b16 %v1286
        %v1303 = vunpack.c.l.b16 %v1287
        %v1304 = vunpack.c.l.b16 %v1288
        %v1305 = vpack.c.b16 %v1302, %v1301
        %v1306 = vpack.c.b16 %v1304, %v1303
        %1309 = vmatprep.subr.bf16.mxu0 0
        %1310 = vmatpush1.bf16.msra.mxu0 %v1305
        %1311 = vmatprep.subr.bf16.mxu0 0
        %1312 = vmatpush1.bf16.msra.mxu0 %v1306
        %1313 = vmatprep.subr.bf16.mxu0 0
        %1314 = vmatpush1.bf16.msra.mxu0 0
        %1315 = vmatprep.subr.bf16.mxu0 0
        %1316 = vmatpush1.bf16.msra.mxu0 0
        %1317 = vmatprep.subr.bf16.mxu0 0
        %1318 = vmatpush1.bf16.msra.mxu0 0
        %1319 = vmatprep.subr.bf16.mxu0 0
        %1320 = vmatpush1.bf16.msra.mxu0 0
        %1321 = vmatprep.subr.bf16.mxu0 0
        %1322 = vmatpush1.bf16.msra.mxu0 0
        %1323 = vmatprep.subr.bf16.mxu0 0
        %1324 = vmatpush1.bf16.msra.mxu0 0
        %1325 = vmatprep.subr.bf16.mxu0 0
        %1326 = vmatpush1.bf16.msra.mxu0 0
        %1327 = vmatprep.subr.bf16.mxu0 0
        %1328 = vmatpush1.bf16.msra.mxu0 0
        %1329 = vmatprep.subr.bf16.mxu0 0
        %1330 = vmatpush1.bf16.msra.mxu0 0
        %1331 = vmatprep.subr.bf16.mxu0 0
        %1332 = vmatpush1.bf16.msra.mxu0 0
        %1333 = vmatprep.subr.bf16.mxu0 0
        %1334 = vmatpush1.bf16.msra.mxu0 0
        %1335 = vmatprep.subr.bf16.mxu0 0
        %1336 = vmatpush1.bf16.msra.mxu0 0
        %1337 = vmatprep.subr.bf16.mxu0 0
        %1338 = vmatpush1.bf16.msra.mxu0 0
        %1339 = vmatprep.subr.bf16.mxu0 0
        %1340 = vmatpush1.bf16.msra.mxu0 0
        %1341 = vmatprep.mubr.bf16.mxu0 0
        %1342 = vmatmul.mubr.bf16.gmra.mrb[0].mxu0 %v608
        %v1343 = vpop.f32.mrb[0].mxu0
        %v1344 = vadd.f32 %v1295, %v1343
        %v1345 = vpop.f32.mrb[0].mxu0
        %v1346 = vpop.f32.mrb[0].mxu0
        %v1347 = vpop.f32.mrb[0].mxu0
        %1348 = vdwg.mxu0
        %s1349 = scalar_lea.vmem %s5, 32
        %v1350 = vld [vmem:[%s1349] sm:$0xf]
        %v1351 = vld [vmem:[%s1349 + $0x4] sm:$0xf]
        %v1352 = vld [vmem:[%s1349 + $0x8] sm:$0xf]
        %v1353 = vld [vmem:[%s1349 + $0xc] sm:$0xf]
        %s1354 = scalar_lea.vmem %s6, 2
        %v1355 = vld [vmem:[%s1354] sm:$0x1]
        %v1357 = vlaneseq
        %v1358 = vshrl.u32 %v1357, 7
        %v1359 = vsub.s32 0, %v1358
        %v1360 = vrot.slane %v1355, %v1359
        %v1366 = vunpack.c.l.b16 %v1350
        %v1367 = vunpack.c.l.b16 %v1351
        %v1368 = vunpack.c.l.b16 %v1352
        %v1369 = vunpack.c.l.b16 %v1353
        %v1370 = vpack.c.b16 %v1367, %v1366
        %v1371 = vpack.c.b16 %v1369, %v1368
        %1374 = vmatprep.subr.bf16.mxu0 0
        %1375 = vmatpush1.bf16.msra.mxu0 %v1370
        %1376 = vmatprep.subr.bf16.mxu0 0
        %1377 = vmatpush1.bf16.msra.mxu0 %v1371
        %1378 = vmatprep.subr.bf16.mxu0 0
        %1379 = vmatpush1.bf16.msra.mxu0 0
        %1380 = vmatprep.subr.bf16.mxu0 0
        %1381 = vmatpush1.bf16.msra.mxu0 0
        %1382 = vmatprep.subr.bf16.mxu0 0
        %1383 = vmatpush1.bf16.msra.mxu0 0
        %1384 = vmatprep.subr.bf16.mxu0 0
        %1385 = vmatpush1.bf16.msra.mxu0 0
        %1386 = vmatprep.subr.bf16.mxu0 0
        %1387 = vmatpush1.bf16.msra.mxu0 0
        %1388 = vmatprep.subr.bf16.mxu0 0
        %1389 = vmatpush1.bf16.msra.mxu0 0
        %1390 = vmatprep.subr.bf16.mxu0 0
        %1391 = vmatpush1.bf16.msra.mxu0 0
        %1392 = vmatprep.subr.bf16.mxu0 0
        %1393 = vmatpush1.bf16.msra.mxu0 0
        %1394 = vmatprep.subr.bf16.mxu0 0
        %1395 = vmatpush1.bf16.msra.mxu0 0
        %1396 = vmatprep.subr.bf16.mxu0 0
        %1397 = vmatpush1.bf16.msra.mxu0 0
        %1398 = vmatprep.subr.bf16.mxu0 0
        %1399 = vmatpush1.bf16.msra.mxu0 0
        %1400 = vmatprep.subr.bf16.mxu0 0
        %1401 = vmatpush1.bf16.msra.mxu0 0
        %1402 = vmatprep.subr.bf16.mxu0 0
        %1403 = vmatpush1.bf16.msra.mxu0 0
        %1404 = vmatprep.subr.bf16.mxu0 0
        %1405 = vmatpush1.bf16.msra.mxu0 0
        %1406 = vmatprep.mubr.bf16.mxu0 0
        %1407 = vmatmul.mubr.bf16.gmra.mrb[0].mxu0 %v608
        %v1408 = vpop.f32.mrb[0].mxu0
        %v1409 = vadd.f32 %v1360, %v1408
        %v1410 = vpop.f32.mrb[0].mxu0
        %v1411 = vpop.f32.mrb[0].mxu0
        %v1412 = vpop.f32.mrb[0].mxu0
        %1413 = vdwg.mxu0
        %s1414 = scalar_lea.vmem %s7, 32
        %v1415 = vld [vmem:[%s1414] sm:$0xf]
        %v1416 = vld [vmem:[%s1414 + $0x4] sm:$0xf]
        %v1417 = vld [vmem:[%s1414 + $0x8] sm:$0xf]
        %v1418 = vld [vmem:[%s1414 + $0xc] sm:$0xf]
        %s1419 = scalar_lea.vmem %s8, 2
        %v1420 = vld [vmem:[%s1419] sm:$0x1]
        %v1422 = vlaneseq
        %v1423 = vshrl.u32 %v1422, 7
        %v1424 = vsub.s32 0, %v1423
        %v1425 = vrot.slane %v1420, %v1424
        %v1431 = vunpack.c.l.b16 %v1415
        %v1432 = vunpack.c.l.b16 %v1416
        %v1433 = vunpack.c.l.b16 %v1417
        %v1434 = vunpack.c.l.b16 %v1418
        %v1435 = vpack.c.b16 %v1432, %v1431
        %v1436 = vpack.c.b16 %v1434, %v1433
        %1439 = vmatprep.subr.bf16.mxu0 0
        %1440 = vmatpush1.bf16.msra.mxu0 %v1435
        %1441 = vmatprep.subr.bf16.mxu0 0
        %1442 = vmatpush1.bf16.msra.mxu0 %v1436
        %1443 = vmatprep.subr.bf16.mxu0 0
        %1444 = vmatpush1.bf16.msra.mxu0 0
        %1445 = vmatprep.subr.bf16.mxu0 0
        %1446 = vmatpush1.bf16.msra.mxu0 0
        %1447 = vmatprep.subr.bf16.mxu0 0
        %1448 = vmatpush1.bf16.msra.mxu0 0
        %1449 = vmatprep.subr.bf16.mxu0 0
        %1450 = vmatpush1.bf16.msra.mxu0 0
        %1451 = vmatprep.subr.bf16.mxu0 0
        %1452 = vmatpush1.bf16.msra.mxu0 0
        %1453 = vmatprep.subr.bf16.mxu0 0
        %1454 = vmatpush1.bf16.msra.mxu0 0
        %1455 = vmatprep.subr.bf16.mxu0 0
        %1456 = vmatpush1.bf16.msra.mxu0 0
        %1457 = vmatprep.subr.bf16.mxu0 0
        %1458 = vmatpush1.bf16.msra.mxu0 0
        %1459 = vmatprep.subr.bf16.mxu0 0
        %1460 = vmatpush1.bf16.msra.mxu0 0
        %1461 = vmatprep.subr.bf16.mxu0 0
        %1462 = vmatpush1.bf16.msra.mxu0 0
        %1463 = vmatprep.subr.bf16.mxu0 0
        %1464 = vmatpush1.bf16.msra.mxu0 0
        %1465 = vmatprep.subr.bf16.mxu0 0
        %1466 = vmatpush1.bf16.msra.mxu0 0
        %1467 = vmatprep.subr.bf16.mxu0 0
        %1468 = vmatpush1.bf16.msra.mxu0 0
        %1469 = vmatprep.subr.bf16.mxu0 0
        %1470 = vmatpush1.bf16.msra.mxu0 0
        %1471 = vmatprep.mubr.bf16.mxu0 0
        %1472 = vmatmul.mubr.bf16.gmra.mrb[0].mxu0 %v608
        %v1473 = vpop.f32.mrb[0].mxu0
        %v1474 = vadd.f32 %v1425, %v1473
        %v1475 = vpop.f32.mrb[0].mxu0
        %v1476 = vpop.f32.mrb[0].mxu0
        %v1477 = vpop.f32.mrb[0].mxu0
        %1478 = vdwg.mxu0
        %v1479 = vpack.c.bf16 %v1344, %v1344
        %v1480 = vpack.c.bf16 %v1409, %v1409
        %v1482 = vsel %vm778, %v1479, 0
        %v1485 = vsel %vm778, %v1480, 0
        %1487 = vmatprep.subr.bf16.mxu0 0
        %1488 = vmatpush1.bf16.xpose.msra.mxu0 %v1485
        %1489 = vmatprep.subr.bf16.mxu0 0
        %1490 = vmatpush1.bf16.xpose.msra.mxu0 0
        %1491 = vmatprep.subr.bf16.mxu0 0
        %1492 = vmatpush1.bf16.xpose.msra.mxu0 0
        %1493 = vmatprep.subr.bf16.mxu0 0
        %1494 = vmatpush1.bf16.xpose.msra.mxu0 0
        %1495 = vmatprep.subr.bf16.mxu0 0
        %1496 = vmatpush1.bf16.xpose.msra.mxu0 0
        %1497 = vmatprep.subr.bf16.mxu0 0
        %1498 = vmatpush1.bf16.xpose.msra.mxu0 0
        %1499 = vmatprep.subr.bf16.mxu0 0
        %1500 = vmatpush1.bf16.xpose.msra.mxu0 0
        %1501 = vmatprep.subr.bf16.mxu0 0
        %1502 = vmatpush1.bf16.xpose.msra.mxu0 0
        %1503 = vmatprep.subr.bf16.mxu0 0
        %1504 = vmatpush1.bf16.xpose.msra.mxu0 0
        %1505 = vmatprep.subr.bf16.mxu0 0
        %1506 = vmatpush1.bf16.xpose.msra.mxu0 0
        %1507 = vmatprep.subr.bf16.mxu0 0
        %1508 = vmatpush1.bf16.xpose.msra.mxu0 0
        %1509 = vmatprep.subr.bf16.mxu0 0
        %1510 = vmatpush1.bf16.xpose.msra.mxu0 0
        %1511 = vmatprep.subr.bf16.mxu0 0
        %1512 = vmatpush1.bf16.xpose.msra.mxu0 0
        %1513 = vmatprep.subr.bf16.mxu0 0
        %1514 = vmatpush1.bf16.xpose.msra.mxu0 0
        %1515 = vmatprep.subr.bf16.mxu0 0
        %1516 = vmatpush1.bf16.xpose.msra.mxu0 0
        %1517 = vmatprep.subr.bf16.mxu0 0
        %1518 = vmatpush1.bf16.xpose.msra.mxu0 0
        %1519 = vmatprep.mubr.bf16.mxu0 0
        %1520 = vmatmul.mubr.bf16.gmra.mrb[0].mxu0 %v1482
        %v1521 = vpop.f32.mrb[0].mxu0
        %v1522 = vadd.f32 %v583, %v1521
        %v1523 = vpop.f32.mrb[0].mxu0
        %v1524 = vpop.f32.mrb[0].mxu0
        %v1525 = vpop.f32.mrb[0].mxu0
        %1526 = vdwg.mxu0
        %v1527 = vsel %vm778, %v1522, -inf
        %1528 = vmax.xlane.f32.xlu0 %v1527
        %v1529 = vpop.xlane.xlu0 %1528
        %v1530 = vsub.f32 %v1522, %v1529
        %v1531 = vmul.f32 %v1530, 1.442695
        %v1532 = vpow.pop %v1531
        %v1533 = vsel %vm778, %v1532, 0.0
        %1534 = vadd.xlane.f32.xlu0 %v1533
        %v1535 = vpop.xlane.xlu0 %1534
        %v1536 = vrcp.pop %v1535
        %v1537 = vmul.f32 %v1532, %v1536
        %v1538 = vpack.c.bf16 %v1537, %v1537
        %v1539 = vpack.c.bf16 %v1474, %v1474
        %v1541 = vsel %vm778, %v1538, 0
        %v1544 = vsel %vm841, %v1539, 0
        %1546 = vmatprep.subr.bf16.mxu0 0
        %1547 = vmatpush1.bf16.msra.mxu0 %v1544
        %1548 = vmatprep.subr.bf16.mxu0 0
        %1549 = vmatpush1.bf16.msra.mxu0 0
        %1550 = vmatprep.subr.bf16.mxu0 0
        %1551 = vmatpush1.bf16.msra.mxu0 0
        %1552 = vmatprep.subr.bf16.mxu0 0
        %1553 = vmatpush1.bf16.msra.mxu0 0
        %1554 = vmatprep.subr.bf16.mxu0 0
        %1555 = vmatpush1.bf16.msra.mxu0 0
        %1556 = vmatprep.subr.bf16.mxu0 0
        %1557 = vmatpush1.bf16.msra.mxu0 0
        %1558 = vmatprep.subr.bf16.mxu0 0
        %1559 = vmatpush1.bf16.msra.mxu0 0
        %1560 = vmatprep.subr.bf16.mxu0 0
        %1561 = vmatpush1.bf16.msra.mxu0 0
        %1562 = vmatprep.subr.bf16.mxu0 0
        %1563 = vmatpush1.bf16.msra.mxu0 0
        %1564 = vmatprep.subr.bf16.mxu0 0
        %1565 = vmatpush1.bf16.msra.mxu0 0
        %1566 = vmatprep.subr.bf16.mxu0 0
        %1567 = vmatpush1.bf16.msra.mxu0 0
        %1568 = vmatprep.subr.bf16.mxu0 0
        %1569 = vmatpush1.bf16.msra.mxu0 0
        %1570 = vmatprep.subr.bf16.mxu0 0
        %1571 = vmatpush1.bf16.msra.mxu0 0
        %1572 = vmatprep.subr.bf16.mxu0 0
        %1573 = vmatpush1.bf16.msra.mxu0 0
        %1574 = vmatprep.subr.bf16.mxu0 0
        %1575 = vmatpush1.bf16.msra.mxu0 0
        %1576 = vmatprep.subr.bf16.mxu0 0
        %1577 = vmatpush1.bf16.msra.mxu0 0
        %1578 = vmatprep.mubr.bf16.mxu0 0
        %1579 = vmatmul.mubr.bf16.gmra.mrb[0].mxu0 %v1541
        %v1580 = vpop.f32.mrb[0].mxu0
        %v1581 = vadd.f32 0.0, %v1580
        %v1582 = vpop.f32.mrb[0].mxu0
        %v1583 = vpop.f32.mrb[0].mxu0
        %v1584 = vpop.f32.mrb[0].mxu0
        %1585 = vdwg.mxu0
        %v1586 = vpack.c.bf16 %v1581, %v1581
        %s1587 = scalar_lea.vmem %s9, 8
        %v1588 = vld [vmem:[%s1587] sm:$0xf]
        %v1590 = vsel %vm778, %v1586, 0
        %v1593 = vsel %vm841, %v1588, 0
        %1595 = vmatprep.subr.bf16.mxu0 0
        %1596 = vmatpush1.bf16.msra.mxu0 %v1593
        %1597 = vmatprep.subr.bf16.mxu0 0
        %1598 = vmatpush1.bf16.msra.mxu0 0
        %1599 = vmatprep.subr.bf16.mxu0 0
        %1600 = vmatpush1.bf16.msra.mxu0 0
        %1601 = vmatprep.subr.bf16.mxu0 0
        %1602 = vmatpush1.bf16.msra.mxu0 0
        %1603 = vmatprep.subr.bf16.mxu0 0
        %1604 = vmatpush1.bf16.msra.mxu0 0
        %1605 = vmatprep.subr.bf16.mxu0 0
        %1606 = vmatpush1.bf16.msra.mxu0 0
        %1607 = vmatprep.subr.bf16.mxu0 0
        %1608 = vmatpush1.bf16.msra.mxu0 0
        %1609 = vmatprep.subr.bf16.mxu0 0
        %1610 = vmatpush1.bf16.msra.mxu0 0
        %1611 = vmatprep.subr.bf16.mxu0 0
        %1612 = vmatpush1.bf16.msra.mxu0 0
        %1613 = vmatprep.subr.bf16.mxu0 0
        %1614 = vmatpush1.bf16.msra.mxu0 0
        %1615 = vmatprep.subr.bf16.mxu0 0
        %1616 = vmatpush1.bf16.msra.mxu0 0
        %1617 = vmatprep.subr.bf16.mxu0 0
        %1618 = vmatpush1.bf16.msra.mxu0 0
        %1619 = vmatprep.subr.bf16.mxu0 0
        %1620 = vmatpush1.bf16.msra.mxu0 0
        %1621 = vmatprep.subr.bf16.mxu0 0
        %1622 = vmatpush1.bf16.msra.mxu0 0
        %1623 = vmatprep.subr.bf16.mxu0 0
        %1624 = vmatpush1.bf16.msra.mxu0 0
        %1625 = vmatprep.subr.bf16.mxu0 0
        %1626 = vmatpush1.bf16.msra.mxu0 0
        %1627 = vmatprep.mubr.bf16.mxu0 0
        %1628 = vmatmul.mubr.bf16.gmra.mrb[0].mxu0 %v1590
        %v1629 = vpop.f32.mrb[0].mxu0
        %v1630 = vadd.f32 0.0, %v1629
        %v1631 = vpop.f32.mrb[0].mxu0
        %v1632 = vpop.f32.mrb[0].mxu0
        %v1633 = vpop.f32.mrb[0].mxu0
        %1634 = vdwg.mxu0
        %v1635 = vadd.f32 %v1279, %v1630
        %s1636 = scalar_lea.vmem %s3, 48
        %v1637 = vld [vmem:[%s1636] sm:$0xf]
        %v1638 = vld [vmem:[%s1636 + $0x4] sm:$0xf]
        %v1639 = vld [vmem:[%s1636 + $0x8] sm:$0xf]
        %v1640 = vld [vmem:[%s1636 + $0xc] sm:$0xf]
        %s1641 = scalar_lea.vmem %s4, 3
        %v1642 = vld [vmem:[%s1641] sm:$0x1]
        %v1644 = vlaneseq
        %v1645 = vshrl.u32 %v1644, 7
        %v1646 = vsub.s32 0, %v1645
        %v1647 = vrot.slane %v1642, %v1646
        %v1653 = vunpack.c.l.b16 %v1637
        %v1654 = vunpack.c.l.b16 %v1638
        %v1655 = vunpack.c.l.b16 %v1639
        %v1656 = vunpack.c.l.b16 %v1640
        %v1657 = vpack.c.b16 %v1654, %v1653
        %v1658 = vpack.c.b16 %v1656, %v1655
        %1661 = vmatprep.subr.bf16.mxu0 0
        %1662 = vmatpush1.bf16.msra.mxu0 %v1657
        %1663 = vmatprep.subr.bf16.mxu0 0
        %1664 = vmatpush1.bf16.msra.mxu0 %v1658
        %1665 = vmatprep.subr.bf16.mxu0 0
        %1666 = vmatpush1.bf16.msra.mxu0 0
        %1667 = vmatprep.subr.bf16.mxu0 0
        %1668 = vmatpush1.bf16.msra.mxu0 0
        %1669 = vmatprep.subr.bf16.mxu0 0
        %1670 = vmatpush1.bf16.msra.mxu0 0
        %1671 = vmatprep.subr.bf16.mxu0 0
        %1672 = vmatpush1.bf16.msra.mxu0 0
        %1673 = vmatprep.subr.bf16.mxu0 0
        %1674 = vmatpush1.bf16.msra.mxu0 0
        %1675 = vmatprep.subr.bf16.mxu0 0
        %1676 = vmatpush1.bf16.msra.mxu0 0
        %1677 = vmatprep.subr.bf16.mxu0 0
        %1678 = vmatpush1.bf16.msra.mxu0 0
        %1679 = vmatprep.subr.bf16.mxu0 0
        %1680 = vmatpush1.bf16.msra.mxu0 0
        %1681 = vmatprep.subr.bf16.mxu0 0
        %1682 = vmatpush1.bf16.msra.mxu0 0
        %1683 = vmatprep.subr.bf16.mxu0 0
        %1684 = vmatpush1.bf16.msra.mxu0 0
        %1685 = vmatprep.subr.bf16.mxu0 0
        %1686 = vmatpush1.bf16.msra.mxu0 0
        %1687 = vmatprep.subr.bf16.mxu0 0
        %1688 = vmatpush1.bf16.msra.mxu0 0
        %1689 = vmatprep.subr.bf16.mxu0 0
        %1690 = vmatpush1.bf16.msra.mxu0 0
        %1691 = vmatprep.subr.bf16.mxu0 0
        %1692 = vmatpush1.bf16.msra.mxu0 0
        %1693 = vmatprep.mubr.bf16.mxu0 0
        %1694 = vmatmul.mubr.bf16.gmra.mrb[0].mxu0 %v608
        %v1695 = vpop.f32.mrb[0].mxu0
        %v1696 = vadd.f32 %v1647, %v1695
        %v1697 = vpop.f32.mrb[0].mxu0
        %v1698 = vpop.f32.mrb[0].mxu0
        %v1699 = vpop.f32.mrb[0].mxu0
        %1700 = vdwg.mxu0
        %s1701 = scalar_lea.vmem %s5, 48
        %v1702 = vld [vmem:[%s1701] sm:$0xf]
        %v1703 = vld [vmem:[%s1701 + $0x4] sm:$0xf]
        %v1704 = vld [vmem:[%s1701 + $0x8] sm:$0xf]
        %v1705 = vld [vmem:[%s1701 + $0xc] sm:$0xf]
        %s1706 = scalar_lea.vmem %s6, 3
        %v1707 = vld [vmem:[%s1706] sm:$0x1]
        %v1709 = vlaneseq
        %v1710 = vshrl.u32 %v1709, 7
        %v1711 = vsub.s32 0, %v1710
        %v1712 = vrot.slane %v1707, %v1711
        %v1718 = vunpack.c.l.b16 %v1702
        %v1719 = vunpack.c.l.b16 %v1703
        %v1720 = vunpack.c.l.b16 %v1704
        %v1721 = vunpack.c.l.b16 %v1705
        %v1722 = vpack.c.b16 %v1719, %v1718
        %v1723 = vpack.c.b16 %v1721, %v1720
        %1726 = vmatprep.subr.bf16.mxu0 0
        %1727 = vmatpush1.bf16.msra.mxu0 %v1722
        %1728 = vmatprep.subr.bf16.mxu0 0
        %1729 = vmatpush1.bf16.msra.mxu0 %v1723
        %1730 = vmatprep.subr.bf16.mxu0 0
        %1731 = vmatpush1.bf16.msra.mxu0 0
        %1732 = vmatprep.subr.bf16.mxu0 0
        %1733 = vmatpush1.bf16.msra.mxu0 0
        %1734 = vmatprep.subr.bf16.mxu0 0
        %1735 = vmatpush1.bf16.msra.mxu0 0
        %1736 = vmatprep.subr.bf16.mxu0 0
        %1737 = vmatpush1.bf16.msra.mxu0 0
        %1738 = vmatprep.subr.bf16.mxu0 0
        %1739 = vmatpush1.bf16.msra.mxu0 0
        %1740 = vmatprep.subr.bf16.mxu0 0
        %1741 = vmatpush1.bf16.msra.mxu0 0
        %1742 = vmatprep.subr.bf16.mxu0 0
        %1743 = vmatpush1.bf16.msra.mxu0 0
        %1744 = vmatprep.subr.bf16.mxu0 0
        %1745 = vmatpush1.bf16.msra.mxu0 0
        %1746 = vmatprep.subr.bf16.mxu0 0
        %1747 = vmatpush1.bf16.msra.mxu0 0
        %1748 = vmatprep.subr.bf16.mxu0 0
        %1749 = vmatpush1.bf16.msra.mxu0 0
        %1750 = vmatprep.subr.bf16.mxu0 0
        %1751 = vmatpush1.bf16.msra.mxu0 0
        %1752 = vmatprep.subr.bf16.mxu0 0
        %1753 = vmatpush1.bf16.msra.mxu0 0
        %1754 = vmatprep.subr.bf16.mxu0 0
        %1755 = vmatpush1.bf16.msra.mxu0 0
        %1756 = vmatprep.subr.bf16.mxu0 0
        %1757 = vmatpush1.bf16.msra.mxu0 0
        %1758 = vmatprep.mubr.bf16.mxu0 0
        %1759 = vmatmul.mubr.bf16.gmra.mrb[0].mxu0 %v608
        %v1760 = vpop.f32.mrb[0].mxu0
        %v1761 = vadd.f32 %v1712, %v1760
        %v1762 = vpop.f32.mrb[0].mxu0
        %v1763 = vpop.f32.mrb[0].mxu0
        %v1764 = vpop.f32.mrb[0].mxu0
        %1765 = vdwg.mxu0
        %s1766 = scalar_lea.vmem %s7, 48
        %v1767 = vld [vmem:[%s1766] sm:$0xf]
        %v1768 = vld [vmem:[%s1766 + $0x4] sm:$0xf]
        %v1769 = vld [vmem:[%s1766 + $0x8] sm:$0xf]
        %v1770 = vld [vmem:[%s1766 + $0xc] sm:$0xf]
        %s1771 = scalar_lea.vmem %s8, 3
        %v1772 = vld [vmem:[%s1771] sm:$0x1]
        %v1774 = vlaneseq
        %v1775 = vshrl.u32 %v1774, 7
        %v1776 = vsub.s32 0, %v1775
        %v1777 = vrot.slane %v1772, %v1776
        %v1783 = vunpack.c.l.b16 %v1767
        %v1784 = vunpack.c.l.b16 %v1768
        %v1785 = vunpack.c.l.b16 %v1769
        %v1786 = vunpack.c.l.b16 %v1770
        %v1787 = vpack.c.b16 %v1784, %v1783
        %v1788 = vpack.c.b16 %v1786, %v1785
        %1791 = vmatprep.subr.bf16.mxu0 0
        %1792 = vmatpush1.bf16.msra.mxu0 %v1787
        %1793 = vmatprep.subr.bf16.mxu0 0
        %1794 = vmatpush1.bf16.msra.mxu0 %v1788
        %1795 = vmatprep.subr.bf16.mxu0 0
        %1796 = vmatpush1.bf16.msra.mxu0 0
        %1797 = vmatprep.subr.bf16.mxu0 0
        %1798 = vmatpush1.bf16.msra.mxu0 0
        %1799 = vmatprep.subr.bf16.mxu0 0
        %1800 = vmatpush1.bf16.msra.mxu0 0
        %1801 = vmatprep.subr.bf16.mxu0 0
        %1802 = vmatpush1.bf16.msra.mxu0 0
        %1803 = vmatprep.subr.bf16.mxu0 0
        %1804 = vmatpush1.bf16.msra.mxu0 0
        %1805 = vmatprep.subr.bf16.mxu0 0
        %1806 = vmatpush1.bf16.msra.mxu0 0
        %1807 = vmatprep.subr.bf16.mxu0 0
        %1808 = vmatpush1.bf16.msra.mxu0 0
        %1809 = vmatprep.subr.bf16.mxu0 0
        %1810 = vmatpush1.bf16.msra.mxu0 0
        %1811 = vmatprep.subr.bf16.mxu0 0
        %1812 = vmatpush1.bf16.msra.mxu0 0
        %1813 = vmatprep.subr.bf16.mxu0 0
        %1814 = vmatpush1.bf16.msra.mxu0 0
        %1815 = vmatprep.subr.bf16.mxu0 0
        %1816 = vmatpush1.bf16.msra.mxu0 0
        %1817 = vmatprep.subr.bf16.mxu0 0
        %1818 = vmatpush1.bf16.msra.mxu0 0
        %1819 = vmatprep.subr.bf16.mxu0 0
        %1820 = vmatpush1.bf16.msra.mxu0 0
        %1821 = vmatprep.subr.bf16.mxu0 0
        %1822 = vmatpush1.bf16.msra.mxu0 0
        %1823 = vmatprep.mubr.bf16.mxu0 0
        %1824 = vmatmul.mubr.bf16.gmra.mrb[0].mxu0 %v608
        %v1825 = vpop.f32.mrb[0].mxu0
        %v1826 = vadd.f32 %v1777, %v1825
        %v1827 = vpop.f32.mrb[0].mxu0
        %v1828 = vpop.f32.mrb[0].mxu0
        %v1829 = vpop.f32.mrb[0].mxu0
        %1830 = vdwg.mxu0
        %v1831 = vpack.c.bf16 %v1696, %v1696
        %v1832 = vpack.c.bf16 %v1761, %v1761
        %v1834 = vsel %vm778, %v1831, 0
        %v1837 = vsel %vm778, %v1832, 0
        %1839 = vmatprep.subr.bf16.mxu0 0
        %1840 = vmatpush1.bf16.xpose.msra.mxu0 %v1837
        %1841 = vmatprep.subr.bf16.mxu0 0
        %1842 = vmatpush1.bf16.xpose.msra.mxu0 0
        %1843 = vmatprep.subr.bf16.mxu0 0
        %1844 = vmatpush1.bf16.xpose.msra.mxu0 0
        %1845 = vmatprep.subr.bf16.mxu0 0
        %1846 = vmatpush1.bf16.xpose.msra.mxu0 0
        %1847 = vmatprep.subr.bf16.mxu0 0
        %1848 = vmatpush1.bf16.xpose.msra.mxu0 0
        %1849 = vmatprep.subr.bf16.mxu0 0
        %1850 = vmatpush1.bf16.xpose.msra.mxu0 0
        %1851 = vmatprep.subr.bf16.mxu0 0
        %1852 = vmatpush1.bf16.xpose.msra.mxu0 0
        %1853 = vmatprep.subr.bf16.mxu0 0
        %1854 = vmatpush1.bf16.xpose.msra.mxu0 0
        %1855 = vmatprep.subr.bf16.mxu0 0
        %1856 = vmatpush1.bf16.xpose.msra.mxu0 0
        %1857 = vmatprep.subr.bf16.mxu0 0
        %1858 = vmatpush1.bf16.xpose.msra.mxu0 0
        %1859 = vmatprep.subr.bf16.mxu0 0
        %1860 = vmatpush1.bf16.xpose.msra.mxu0 0
        %1861 = vmatprep.subr.bf16.mxu0 0
        %1862 = vmatpush1.bf16.xpose.msra.mxu0 0
        %1863 = vmatprep.subr.bf16.mxu0 0
        %1864 = vmatpush1.bf16.xpose.msra.mxu0 0
        %1865 = vmatprep.subr.bf16.mxu0 0
        %1866 = vmatpush1.bf16.xpose.msra.mxu0 0
        %1867 = vmatprep.subr.bf16.mxu0 0
        %1868 = vmatpush1.bf16.xpose.msra.mxu0 0
        %1869 = vmatprep.subr.bf16.mxu0 0
        %1870 = vmatpush1.bf16.xpose.msra.mxu0 0
        %1871 = vmatprep.mubr.bf16.mxu0 0
        %1872 = vmatmul.mubr.bf16.gmra.mrb[0].mxu0 %v1834
        %v1873 = vpop.f32.mrb[0].mxu0
        %v1874 = vadd.f32 %v583, %v1873
        %v1875 = vpop.f32.mrb[0].mxu0
        %v1876 = vpop.f32.mrb[0].mxu0
        %v1877 = vpop.f32.mrb[0].mxu0
        %1878 = vdwg.mxu0
        %v1879 = vsel %vm778, %v1874, -inf
        %1880 = vmax.xlane.f32.xlu0 %v1879
        %v1881 = vpop.xlane.xlu0 %1880
        %v1882 = vsub.f32 %v1874, %v1881
        %v1883 = vmul.f32 %v1882, 1.442695
        %v1884 = vpow.pop %v1883
        %v1885 = vsel %vm778, %v1884, 0.0
        %1886 = vadd.xlane.f32.xlu0 %v1885
        %v1887 = vpop.xlane.xlu0 %1886
        %v1888 = vrcp.pop %v1887
        %v1889 = vmul.f32 %v1884, %v1888
        %v1890 = vpack.c.bf16 %v1889, %v1889
        %v1891 = vpack.c.bf16 %v1826, %v1826
        %v1893 = vsel %vm778, %v1890, 0
        %v1896 = vsel %vm841, %v1891, 0
        %1898 = vmatprep.subr.bf16.mxu0 0
        %1899 = vmatpush1.bf16.msra.mxu0 %v1896
        %1900 = vmatprep.subr.bf16.mxu0 0
        %1901 = vmatpush1.bf16.msra.mxu0 0
        %1902 = vmatprep.subr.bf16.mxu0 0
        %1903 = vmatpush1.bf16.msra.mxu0 0
        %1904 = vmatprep.subr.bf16.mxu0 0
        %1905 = vmatpush1.bf16.msra.mxu0 0
        %1906 = vmatprep.subr.bf16.mxu0 0
        %1907 = vmatpush1.bf16.msra.mxu0 0
        %1908 = vmatprep.subr.bf16.mxu0 0
        %1909 = vmatpush1.bf16.msra.mxu0 0
        %1910 = vmatprep.subr.bf16.mxu0 0
        %1911 = vmatpush1.bf16.msra.mxu0 0
        %1912 = vmatprep.subr.bf16.mxu0 0
        %1913 = vmatpush1.bf16.msra.mxu0 0
        %1914 = vmatprep.subr.bf16.mxu0 0
        %1915 = vmatpush1.bf16.msra.mxu0 0
        %1916 = vmatprep.subr.bf16.mxu0 0
        %1917 = vmatpush1.bf16.msra.mxu0 0
        %1918 = vmatprep.subr.bf16.mxu0 0
        %1919 = vmatpush1.bf16.msra.mxu0 0
        %1920 = vmatprep.subr.bf16.mxu0 0
        %1921 = vmatpush1.bf16.msra.mxu0 0
        %1922 = vmatprep.subr.bf16.mxu0 0
        %1923 = vmatpush1.bf16.msra.mxu0 0
        %1924 = vmatprep.subr.bf16.mxu0 0
        %1925 = vmatpush1.bf16.msra.mxu0 0
        %1926 = vmatprep.subr.bf16.mxu0 0
        %1927 = vmatpush1.bf16.msra.mxu0 0
        %1928 = vmatprep.subr.bf16.mxu0 0
        %1929 = vmatpush1.bf16.msra.mxu0 0
        %1930 = vmatprep.mubr.bf16.mxu0 0
        %1931 = vmatmul.mubr.bf16.gmra.mrb[0].mxu0 %v1893
        %v1932 = vpop.f32.mrb[0].mxu0
        %v1933 = vadd.f32 0.0, %v1932
        %v1934 = vpop.f32.mrb[0].mxu0
        %v1935 = vpop.f32.mrb[0].mxu0
        %v1936 = vpop.f32.mrb[0].mxu0
        %1937 = vdwg.mxu0
        %v1938 = vpack.c.bf16 %v1933, %v1933
        %s1939 = scalar_lea.vmem %s9, 12
        %v1940 = vld [vmem:[%s1939] sm:$0xf]
        %v1942 = vsel %vm778, %v1938, 0
        %v1945 = vsel %vm841, %v1940, 0
        %1947 = vmatprep.subr.bf16.mxu0 0
        %1948 = vmatpush1.bf16.msra.mxu0 %v1945
        %1949 = vmatprep.subr.bf16.mxu0 0
        %1950 = vmatpush1.bf16.msra.mxu0 0
        %1951 = vmatprep.subr.bf16.mxu0 0
        %1952 = vmatpush1.bf16.msra.mxu0 0
        %1953 = vmatprep.subr.bf16.mxu0 0
        %1954 = vmatpush1.bf16.msra.mxu0 0
        %1955 = vmatprep.subr.bf16.mxu0 0
        %1956 = vmatpush1.bf16.msra.mxu0 0
        %1957 = vmatprep.subr.bf16.mxu0 0
        %1958 = vmatpush1.bf16.msra.mxu0 0
        %1959 = vmatprep.subr.bf16.mxu0 0
        %1960 = vmatpush1.bf16.msra.mxu0 0
        %1961 = vmatprep.subr.bf16.mxu0 0
        %1962 = vmatpush1.bf16.msra.mxu0 0
        %1963 = vmatprep.subr.bf16.mxu0 0
        %1964 = vmatpush1.bf16.msra.mxu0 0
        %1965 = vmatprep.subr.bf16.mxu0 0
        %1966 = vmatpush1.bf16.msra.mxu0 0
        %1967 = vmatprep.subr.bf16.mxu0 0
        %1968 = vmatpush1.bf16.msra.mxu0 0
        %1969 = vmatprep.subr.bf16.mxu0 0
        %1970 = vmatpush1.bf16.msra.mxu0 0
        %1971 = vmatprep.subr.bf16.mxu0 0
        %1972 = vmatpush1.bf16.msra.mxu0 0
        %1973 = vmatprep.subr.bf16.mxu0 0
        %1974 = vmatpush1.bf16.msra.mxu0 0
        %1975 = vmatprep.subr.bf16.mxu0 0
        %1976 = vmatpush1.bf16.msra.mxu0 0
        %1977 = vmatprep.subr.bf16.mxu0 0
        %1978 = vmatpush1.bf16.msra.mxu0 0
        %1979 = vmatprep.mubr.bf16.mxu0 0
        %1980 = vmatmul.mubr.bf16.gmra.mrb[0].mxu0 %v1942
        %v1981 = vpop.f32.mrb[0].mxu0
        %v1982 = vadd.f32 0.0, %v1981
        %v1983 = vpop.f32.mrb[0].mxu0
        %v1984 = vpop.f32.mrb[0].mxu0
        %v1985 = vpop.f32.mrb[0].mxu0
        %1986 = vdwg.mxu0
        %v1987 = vadd.f32 %v1635, %v1982
        %v1988 = vld [vmem:[%s10] sm:$0x1]
        %v1990 = vlaneseq
        %v1991 = vshrl.u32 %v1990, 7
        %v1992 = vsub.s32 0, %v1991
        %v1993 = vrot.slane %v1988, %v1992
        %v1995 = vadd.f32 %v1987, %v1993
        %v1996 = vadd.f32 %v545, %v1995
        %v1997 = vld [vmem:[%s11] sm:$0x1]
        %v1998 = vld [vmem:[%s12] sm:$0x1]
        %v1999 = vsel %vm548, %v1996, 0.0
        %2000 = vadd.xlane.f32.xlu0 %v1999
        %v2001 = vpop.xlane.xlu0 %2000
        %v2002 = vmul.f32 %v2001, %v552
        %v2003 = vsub.f32 %v1996, %v2002
        %v2004 = vmul.f32 %v2003, %v2003
        %v2005 = vsel %vm548, %v2004, 0.0
        %2006 = vadd.xlane.f32.xlu0 %v2005
        %v2007 = vpop.xlane.xlu0 %2006
        %v2008 = vmul.f32 %v2007, %v552
        %v2009 = vadd.f32 %v2008, 1e-05
        %v2010 = vrsqrt.pop %v2009
        %v2011 = vmul.f32 %v2003, %v2010
        %v2013 = vlaneseq
        %v2014 = vshrl.u32 %v2013, 7
        %v2015 = vsub.s32 0, %v2014
        %v2016 = vrot.slane %v1997, %v2015
        %v2018 = vmul.f32 %v2011, %v2016
        %v2020 = vlaneseq
        %v2021 = vshrl.u32 %v2020, 7
        %v2022 = vsub.s32 0, %v2021
        %v2023 = vrot.slane %v1998, %v2022
        %v2025 = vadd.f32 %v2018, %v2023
        %v2026 = vpack.c.bf16 %v2025, %v2025
        %v2027 = vld [vmem:[%s13] sm:$0xf]
        %v2028 = vld [vmem:[%s13 + $0x4] sm:$0xf]
        %v2029 = vld [vmem:[%s13 + $0x8] sm:$0xf]
        %v2030 = vld [vmem:[%s13 + $0xc] sm:$0xf]
        %v2031 = vld [vmem:[%s14] sm:$0x1]
        %v2033 = vlaneseq
        %v2034 = vshrl.u32 %v2033, 7
        %v2035 = vsub.s32 0, %v2034
        %v2036 = vrot.slane %v2031, %v2035
        %v2042 = vunpack.c.l.b16 %v2027
        %v2043 = vunpack.c.l.b16 %v2028
        %v2044 = vunpack.c.l.b16 %v2029
        %v2045 = vunpack.c.l.b16 %v2030
        %v2046 = vpack.c.b16 %v2043, %v2042
        %v2047 = vpack.c.b16 %v2045, %v2044
        %v2051 = vsel %vm548, %v2026, 0
        %2053 = vmatprep.subr.bf16.mxu0 0
        %2054 = vmatpush1.bf16.msra.mxu0 %v2046
        %2055 = vmatprep.subr.bf16.mxu0 0
        %2056 = vmatpush1.bf16.msra.mxu0 %v2047
        %2057 = vmatprep.subr.bf16.mxu0 0
        %2058 = vmatpush1.bf16.msra.mxu0 0
        %2059 = vmatprep.subr.bf16.mxu0 0
        %2060 = vmatpush1.bf16.msra.mxu0 0
        %2061 = vmatprep.subr.bf16.mxu0 0
        %2062 = vmatpush1.bf16.msra.mxu0 0
        %2063 = vmatprep.subr.bf16.mxu0 0
        %2064 = vmatpush1.bf16.msra.mxu0 0
        %2065 = vmatprep.subr.bf16.mxu0 0
        %2066 = vmatpush1.bf16.msra.mxu0 0
        %2067 = vmatprep.subr.bf16.mxu0 0
        %2068 = vmatpush1.bf16.msra.mxu0 0
        %2069 = vmatprep.subr.bf16.mxu0 0
        %2070 = vmatpush1.bf16.msra.mxu0 0
        %2071 = vmatprep.subr.bf16.mxu0 0
        %2072 = vmatpush1.bf16.msra.mxu0 0
        %2073 = vmatprep.subr.bf16.mxu0 0
        %2074 = vmatpush1.bf16.msra.mxu0 0
        %2075 = vmatprep.subr.bf16.mxu0 0
        %2076 = vmatpush1.bf16.msra.mxu0 0
        %2077 = vmatprep.subr.bf16.mxu0 0
        %2078 = vmatpush1.bf16.msra.mxu0 0
        %2079 = vmatprep.subr.bf16.mxu0 0
        %2080 = vmatpush1.bf16.msra.mxu0 0
        %2081 = vmatprep.subr.bf16.mxu0 0
        %2082 = vmatpush1.bf16.msra.mxu0 0
        %2083 = vmatprep.subr.bf16.mxu0 0
        %2084 = vmatpush1.bf16.msra.mxu0 0
        %2085 = vmatprep.mubr.bf16.mxu0 0
        %2086 = vmatmul.mubr.bf16.gmra.mrb[0].mxu0 %v2051
        %v2087 = vpop.f32.mrb[0].mxu0
        %v2088 = vadd.f32 %v2036, %v2087
        %v2089 = vpop.f32.mrb[0].mxu0
        %v2090 = vpop.f32.mrb[0].mxu0
        %v2091 = vpop.f32.mrb[0].mxu0
        %2092 = vdwg.mxu0
        %v2093 = vmul.f32 %v2088, 0.5
        %v2094 = vmul.f32 %v2088, 0.044715
        %v2095 = vmul.f32 %v2094, %v2088
        %v2096 = vmul.f32 %v2095, %v2088
        %v2097 = vadd.f32 %v2088, %v2096
        %v2098 = vmul.f32 %v2097, 0.7978846
        %v2099 = vtanh.pop %v2098
        %v2100 = vadd.f32 %v2099, 1.0
        %v2101 = vmul.f32 %v2093, %v2100
        %v2102 = vpack.c.bf16 %v2101, %v2101
        %v2103 = vld [vmem:[%s15] sm:$0xf]
        %v2104 = vld [vmem:[%s15 + $0x4] sm:$0xf]
        %v2105 = vld [vmem:[%s15 + $0x8] sm:$0xf]
        %v2106 = vld [vmem:[%s15 + $0xc] sm:$0xf]
        %v2107 = vld [vmem:[%s15 + $0x10] sm:$0xf]
        %v2108 = vld [vmem:[%s15 + $0x14] sm:$0xf]
        %v2109 = vld [vmem:[%s15 + $0x18] sm:$0xf]
        %v2110 = vld [vmem:[%s15 + $0x1c] sm:$0xf]
        %v2111 = vld [vmem:[%s15 + $0x20] sm:$0xf]
        %v2112 = vld [vmem:[%s15 + $0x24] sm:$0xf]
        %v2113 = vld [vmem:[%s15 + $0x28] sm:$0xf]
        %v2114 = vld [vmem:[%s15 + $0x2c] sm:$0xf]
        %v2115 = vld [vmem:[%s15 + $0x30] sm:$0xf]
        %v2116 = vld [vmem:[%s15 + $0x34] sm:$0xf]
        %v2117 = vld [vmem:[%s15 + $0x38] sm:$0xf]
        %v2118 = vld [vmem:[%s15 + $0x3c] sm:$0xf]
        %v2119 = vld [vmem:[%s16] sm:$0x1]
        %v2121 = vlaneseq
        %v2122 = vshrl.u32 %v2121, 7
        %v2123 = vsub.s32 0, %v2122
        %v2124 = vrot.slane %v2119, %v2123
        %v2142 = vunpack.c.l.b16 %v2103
        %v2143 = vunpack.c.l.b16 %v2104
        %v2144 = vunpack.c.l.b16 %v2105
        %v2145 = vunpack.c.l.b16 %v2106
        %v2146 = vunpack.c.l.b16 %v2107
        %v2147 = vunpack.c.l.b16 %v2108
        %v2148 = vunpack.c.l.b16 %v2109
        %v2149 = vunpack.c.l.b16 %v2110
        %v2150 = vunpack.c.l.b16 %v2111
        %v2151 = vunpack.c.l.b16 %v2112
        %v2152 = vunpack.c.l.b16 %v2113
        %v2153 = vunpack.c.l.b16 %v2114
        %v2154 = vunpack.c.l.b16 %v2115
        %v2155 = vunpack.c.l.b16 %v2116
        %v2156 = vunpack.c.l.b16 %v2117
        %v2157 = vunpack.c.l.b16 %v2118
        %v2158 = vpack.c.b16 %v2143, %v2142
        %v2159 = vpack.c.b16 %v2145, %v2144
        %v2160 = vpack.c.b16 %v2147, %v2146
        %v2161 = vpack.c.b16 %v2149, %v2148
        %v2162 = vpack.c.b16 %v2151, %v2150
        %v2163 = vpack.c.b16 %v2153, %v2152
        %v2164 = vpack.c.b16 %v2155, %v2154
        %v2165 = vpack.c.b16 %v2157, %v2156
        %2174 = vmatprep.subr.bf16.mxu0 0
        %2175 = vmatpush1.bf16.msra.mxu0 %v2158
        %2176 = vmatprep.subr.bf16.mxu0 0
        %2177 = vmatpush1.bf16.msra.mxu0 %v2159
        %2178 = vmatprep.subr.bf16.mxu0 0
        %2179 = vmatpush1.bf16.msra.mxu0 %v2160
        %2180 = vmatprep.subr.bf16.mxu0 0
        %2181 = vmatpush1.bf16.msra.mxu0 %v2161
        %2182 = vmatprep.subr.bf16.mxu0 0
        %2183 = vmatpush1.bf16.msra.mxu0 %v2162
        %2184 = vmatprep.subr.bf16.mxu0 0
        %2185 = vmatpush1.bf16.msra.mxu0 %v2163
        %2186 = vmatprep.subr.bf16.mxu0 0
        %2187 = vmatpush1.bf16.msra.mxu0 %v2164
        %2188 = vmatprep.subr.bf16.mxu0 0
        %2189 = vmatpush1.bf16.msra.mxu0 %v2165
        %2190 = vmatprep.subr.bf16.mxu0 0
        %2191 = vmatpush1.bf16.msra.mxu0 0
        %2192 = vmatprep.subr.bf16.mxu0 0
        %2193 = vmatpush1.bf16.msra.mxu0 0
        %2194 = vmatprep.subr.bf16.mxu0 0
        %2195 = vmatpush1.bf16.msra.mxu0 0
        %2196 = vmatprep.subr.bf16.mxu0 0
        %2197 = vmatpush1.bf16.msra.mxu0 0
        %2198 = vmatprep.subr.bf16.mxu0 0
        %2199 = vmatpush1.bf16.msra.mxu0 0
        %2200 = vmatprep.subr.bf16.mxu0 0
        %2201 = vmatpush1.bf16.msra.mxu0 0
        %2202 = vmatprep.subr.bf16.mxu0 0
        %2203 = vmatpush1.bf16.msra.mxu0 0
        %2204 = vmatprep.subr.bf16.mxu0 0
        %2205 = vmatpush1.bf16.msra.mxu0 0
        %2206 = vmatprep.mubr.bf16.mxu0 0
        %2207 = vmatmul.mubr.bf16.gmra.mrb[0].mxu0 %v2102
        %v2208 = vpop.f32.mrb[0].mxu0
        %v2209 = vadd.f32 %v2124, %v2208
        %v2210 = vpop.f32.mrb[0].mxu0
        %v2211 = vpop.f32.mrb[0].mxu0
        %v2212 = vpop.f32.mrb[0].mxu0
        %2213 = vdwg.mxu0
        %v2214 = vadd.f32 %v1996, %v2209
        %2215 = vst.msk [vmem:[%s539] sm:$0xff] %vm548, %v2214
        %s2216 = sand.u32 %s401, 1
        %s2217 = scalar_lea.sflag [#allocation3], %s2216
        %s2218 = sand.u32 %s401, 1
        %s2219 = smul.addr %s2218, 8
        %s2220 = scalar_lea.vmem [#allocation2], %s2219
        // Predicated region
        $region89: #{gpt2_block.1} parent=87 // pred_check
          %p2221 = pneg %p411
        $region90: #{gpt2_block.1} parent=87 // pred_check_branch
          %2223 = sbr.rel (%p2221) target = $region92
        $region91: #{gpt2_block.1} parent=87 // pred_region
          %s2225 = ssub.s32 128, 128
          %2226 = vsyncadd %s2217, %s2225
          %s2227 = smul.addr %s31, 128
          %s2228 = scalar_lea.hbm %s17, %s2227
          %s2230 = sshll.u32 %s2220, 4
          %s2231 = int_to_ptr.vmem [resolvable:$true] %s2230
          %2233 = dma.vmem_to_hbm [thread:$0]  %s2231, 128, %s2228, %s2217
        $region92: #{gpt2_block.1} parent=87 // pred_fallthru
          _
      $region88: #{gpt2_block.1} parent=5 // pred_fallthru
        _
      %p2234 = scmp.le.s32.totalorder 2, %s26
      // Predicated region
      $region93: #{gpt2_block.1} parent=5 // pred_check
        %p2235 = pneg %p2234
      $region94: #{gpt2_block.1} parent=5 // pred_check_branch
        %2237 = sbr.rel (%p2235) target = $region96
      $region95: #{gpt2_block.1} parent=5 // pred_region
        %s2238 = ssub.s32 %s26, 2
        // Predicated region
        $region97: #{gpt2_block.1} parent=95 // pred_check
          %p2239 = pneg %p417
        $region98: #{gpt2_block.1} parent=95 // pred_check_branch
          %2241 = sbr.rel (%p2239) target = $region100
        $region99: #{gpt2_block.1} parent=95 // pred_region
          %s2242 = sand.u32 %s402, 1
          %s2243 = scalar_lea.sflag [#allocation3], %s2242
          %s2244 = sand.u32 %s402, 1
          %s2245 = smul.addr %s2244, 8
          %s2246 = scalar_lea.vmem [#allocation2], %s2245
          %2247 = dma.done %s2243, 128
        $region100: #{gpt2_block.1} parent=95 // pred_fallthru
          _
      $region96: #{gpt2_block.1} parent=5 // pred_fallthru
        _
    $region6: #{gpt2_block.1} parent=1 // loop_footer
      %s30 = sadd.s32 1, %s26
    $region7: #{gpt2_block.1} parent=1 // loop_footer_branch
      %25 = sbr.rel target = $region3
    $region8: #{gpt2_block.1} parent=1 // loop_exit
      _
    %2248 = vsyncpa [#allocation3], 1
    %s2249 = scalar_lea.sflag [#allocation3], 1
    %2250 = vsyncpa %s2249, 1

</llo_original>
